<compile_context>
chip_gen: v6e
topology: v6e:2x2x1
jax: 0.10.0
libtpu: 0.0.40
codegen_flags: <defaults>
</compile_context>

<pallas_src>
import functools

import numpy as np
import jax
import jax.numpy as jnp
from jax.experimental import pallas as pl
from jax.experimental.pallas import tpu as pltpu

LEAKY_SLOPE = 0.01
BN_EPS = 1e-5
LANE = 128


# ---------------------------------------------------------------------------
# in-kernel helpers
# ---------------------------------------------------------------------------
def _zero_border(pad_ref, Hh, Wh):
    """Zero only the 1-px border of the (Hh+2, Wh+2, C) pad scratch."""
    C = pad_ref.shape[-1]
    dt = pad_ref.dtype
    pad_ref[0:1, :, :] = jnp.zeros((1, Wh + 2, C), dt)
    pad_ref[Hh + 1:Hh + 2, :, :] = jnp.zeros((1, Wh + 2, C), dt)
    pad_ref[:, 0:1, :] = jnp.zeros((Hh + 2, 1, C), dt)
    pad_ref[:, Wh + 1:Wh + 2, :] = jnp.zeros((Hh + 2, 1, C), dt)


def _conv3x3_from_pad(pad_ref, w_ref, Hh, Wh, per_tap):
    """3x3 'SAME' conv from a zero-padded f32 VMEM tile.

    per_tap=True : w_ref is (9, Ci, Co) bf16 -> 9 accumulating MXU dots
                   (K = Ci per tap); no im2col patch tensor is materialized.
    per_tap=False: w_ref is (9*Ci, Co) bf16 -> one tiny im2col concat + a
                   single dot (only used for shallow Ci, where 9*Ci is small).
    Returns (Hh*Wh, Co) f32.
    """
    Ci = pad_ref.shape[-1]
    if per_tap:
        acc = None
        t = 0
        for dy in range(3):
            for dx in range(3):
                tap = pad_ref[dy:dy + Hh, dx:dx + Wh, :].reshape(Hh * Wh, Ci)
                d = jnp.dot(tap.astype(jnp.bfloat16), w_ref[t],
                            preferred_element_type=jnp.float32)
                acc = d if acc is None else acc + d
                t += 1
        return acc
    taps = [pad_ref[dy:dy + Hh, dx:dx + Wh, :]
            for dy in range(3) for dx in range(3)]
    patches = jnp.concatenate(taps, axis=-1).reshape(Hh * Wh, 9 * Ci)
    return jnp.dot(patches.astype(jnp.bfloat16), w_ref[...],
                   preferred_element_type=jnp.float32)


def _stats(acc):
    """Per-image [sum; sum-of-squares] over the spatial axis (f32, exact)."""
    return jnp.concatenate(
        [jnp.sum(acc, axis=0, keepdims=True),
         jnp.sum(acc * acc, axis=0, keepdims=True)], axis=0)


# ---------------------------------------------------------------------------
# Kernels
# ---------------------------------------------------------------------------
def pool_conv1_kernel(x_ref, w_ref, o_ref, stats_ref, xpad_ref, *, per_tap):
    """x_ref : (1, Hh, 2, Wh, 2*Ci) bf16 input, free-reshaped so the 2x2 pool
               is a major-dim max + a static lane split.
       w_ref : (9, Ci, Cp) or (9*Ci, Cp) bf16 conv1 weights (Cp lane-padded).
       o_ref : (1, Hh, Wh, Cp) bf16 conv1 output.
       stats_ref: (1, 2, Cp) f32 per-image [sum; sumsq].
       xpad_ref : VMEM (Hh+2, Wh+2, Ci) f32 zero-padded pooled tile."""
    Hh, Wh, Cp = o_ref.shape[1], o_ref.shape[2], o_ref.shape[3]
    Ci = xpad_ref.shape[-1]

    # 2x2 max-pool entirely in VMEM.
    xh = jnp.maximum(x_ref[0, :, 0], x_ref[0, :, 1])          # (Hh, Wh, 2*Ci)
    xp = jnp.maximum(xh[:, :, :Ci], xh[:, :, Ci:])            # (Hh, Wh, Ci)

    _zero_border(xpad_ref, Hh, Wh)                            # border only
    xpad_ref[1:Hh + 1, 1:Wh + 1, :] = xp.astype(xpad_ref.dtype)

    acc = _conv3x3_from_pad(xpad_ref, w_ref, Hh, Wh, per_tap)  # (Hh*Wh,Cp) f32
    o_ref[0] = acc.reshape(Hh, Wh, Cp).astype(o_ref.dtype)
    stats_ref[0] = _stats(acc)


def bn_act_conv2_kernel(y_ref, scale_ref, shift_ref, w_ref, o_ref, stats_ref,
                        apad_ref):
    """Fused BN1-apply + LeakyReLU + zero-pad + 3x3 conv #2 + BN2 stats.
       y_ref: (1, Hh, Wh, Cp) bf16; scale/shift: (1,1,1,Cp) f32;
       w_ref: (9, Cp, Cp) bf16; o_ref: (1, Hh, Wh, Cp) bf16;
       stats_ref: (1, 2, Cp) f32; apad_ref: VMEM (Hh+2, Wh+2, Cp) f32."""
    Hh, Wh, Cp = o_ref.shape[1], o_ref.shape[2], o_ref.shape[3]

    # Upcast the bf16 activation and do BN1 + LeakyReLU in f32 (v5e: no bf16 VPU).
    a = y_ref[...].astype(jnp.float32) * scale_ref[...] + shift_ref[...]
    a = jnp.where(a >= 0.0, a, LEAKY_SLOPE * a)

    _zero_border(apad_ref, Hh, Wh)
    apad_ref[1:Hh + 1, 1:Wh + 1, :] = a[0]

    acc = _conv3x3_from_pad(apad_ref, w_ref, Hh, Wh, per_tap=True)
    o_ref[0] = acc.reshape(Hh, Wh, Cp).astype(o_ref.dtype)
    stats_ref[0] = _stats(acc)


# ---------------------------------------------------------------------------
# Pallas wrappers
# ---------------------------------------------------------------------------
def _compiler_params():
    vmem_cap = 128 * 1024 * 1024
    try:  # v7x has only 64 MiB VMEM per TC -> cap the scoped limit at ~48 MiB
        vmem_cap = int(pltpu.get_tpu_info().vmem_capacity_bytes)
    except Exception:
        pass
    limit = int(min(64 * 1024 * 1024, (vmem_cap * 3) // 4))
    return pltpu.CompilerParams(dimension_semantics=("parallel",),
                                vmem_limit_bytes=limit)


def _pool_conv1(x5, w1m, Hh, Wh, Ci, Cp, per_tap):
    N = x5.shape[0]
    kernel = functools.partial(pool_conv1_kernel, per_tap=per_tap)
    w_spec = (pl.BlockSpec((9, Ci, Cp), lambda n: (0, 0, 0)) if per_tap
              else pl.BlockSpec((9 * Ci, Cp), lambda n: (0, 0)))
    return pl.pallas_call(
        kernel,
        out_shape=(jax.ShapeDtypeStruct((N, Hh, Wh, Cp), jnp.bfloat16),
                   jax.ShapeDtypeStruct((N, 2, Cp), jnp.float32)),
        grid=(N,),
        in_specs=[
            pl.BlockSpec((1, Hh, 2, Wh, 2 * Ci), lambda n: (n, 0, 0, 0, 0)),
            w_spec,
        ],
        out_specs=(pl.BlockSpec((1, Hh, Wh, Cp), lambda n: (n, 0, 0, 0)),
                   pl.BlockSpec((1, 2, Cp), lambda n: (n, 0, 0))),
        scratch_shapes=[pltpu.VMEM((Hh + 2, Wh + 2, Ci), jnp.float32)],
        compiler_params=_compiler_params(),
    )(x5, w1m)


def _bn_act_conv2(y1, scale1, shift1, w2m, Hh, Wh, Cp):
    N = y1.shape[0]
    return pl.pallas_call(
        bn_act_conv2_kernel,
        out_shape=(jax.ShapeDtypeStruct((N, Hh, Wh, Cp), jnp.bfloat16),
                   jax.ShapeDtypeStruct((N, 2, Cp), jnp.float32)),
        grid=(N,),
        in_specs=[
            pl.BlockSpec((1, Hh, Wh, Cp), lambda n: (n, 0, 0, 0)),
            pl.BlockSpec((1, 1, 1, Cp), lambda n: (0, 0, 0, 0)),
            pl.BlockSpec((1, 1, 1, Cp), lambda n: (0, 0, 0, 0)),
            pl.BlockSpec((9, Cp, Cp), lambda n: (0, 0, 0)),
        ],
        out_specs=(pl.BlockSpec((1, Hh, Wh, Cp), lambda n: (n, 0, 0, 0)),
                   pl.BlockSpec((1, 2, Cp), lambda n: (n, 0, 0))),
        scratch_shapes=[pltpu.VMEM((Hh + 2, Wh + 2, Cp), jnp.float32)],
        compiler_params=_compiler_params(),
    )(y1, scale1, shift1, w2m)


def _fold_bn(stats, gamma, beta, count):
    """stats: (N, 2, C) per-image [sum; sumsq] -> per-channel (scale, shift)."""
    s = jnp.sum(stats[:, 0, :], axis=0)
    ss = jnp.sum(stats[:, 1, :], axis=0)
    mean = s / count
    var = jnp.maximum(ss / count - mean * mean, 0.0)          # biased (training BN)
    scale = gamma / jnp.sqrt(var + BN_EPS)
    shift = beta - mean * scale
    return scale, shift


# ---------------------------------------------------------------------------
# Down.forward
# ---------------------------------------------------------------------------
def down_forward(x_nchw, params):
    """x_nchw: (N, Cin, H, W) -> (N, Cout, H//2, W//2).  Assumes H, W even."""
    w1, g1, b1, w2, g2, b2 = (params[k] for k in ("w1", "g1", "b1", "w2", "g2", "b2"))
    N, Ci, H, W = x_nchw.shape
    Co = w1.shape[-1]
    Hh, Wh = H // 2, W // 2
    Cp = ((Co + LANE - 1) // LANE) * LANE                     # lane-dense out channels

    # NCHW -> NHWC in bf16 (max-pool commutes with the later bf16 MXU rounding,
    # so this only halves the input HBM stream), then a FREE reshape so the 2x2
    # pool needs only major-dim indexing + a static lane split.
    x = jnp.transpose(x_nchw, (0, 2, 3, 1)).astype(jnp.bfloat16)
    x5 = x.reshape(N, Hh, 2, Wh, 2 * Ci)

    # Weights as bf16, Co padded to a lane multiple; BN params zero-padded so
    # the padded output channels stay exactly 0 through the whole pipeline.
    per_tap1 = Ci >= 64   # lane-dense input channels -> per-tap accumulating dots
    if per_tap1:
        w1m = jnp.pad(w1, ((0, 0), (0, 0), (0, Cp - Co))).astype(jnp.bfloat16)
    else:
        w1m = jnp.pad(w1.reshape(9 * Ci, Co),
                      ((0, 0), (0, Cp - Co))).astype(jnp.bfloat16)
    w2m = jnp.pad(w2, ((0, 0), (0, Cp - Co), (0, Cp - Co))).astype(jnp.bfloat16)
    g1p = jnp.pad(g1.astype(jnp.float32), (0, Cp - Co))
    b1p = jnp.pad(b1.astype(jnp.float32), (0, Cp - Co))
    g2p = jnp.pad(g2.astype(jnp.float32), (0, Cp - Co))
    b2p = jnp.pad(b2.astype(jnp.float32), (0, Cp - Co))

    cnt = float(N * Hh * Wh)

    # K1: maxpool + conv1 + BN1 partial stats (y1 stored bf16, stats f32-exact)
    y1, st1 = _pool_conv1(x5, w1m, Hh, Wh, Ci, Cp, per_tap1)
    scale1, shift1 = _fold_bn(st1, g1p, b1p, cnt)

    # K2: BN1-apply + LeakyReLU + conv2 + BN2 partial stats
    y2, st2 = _bn_act_conv2(y1, scale1.reshape(1, 1, 1, Cp),
                            shift1.reshape(1, 1, 1, Cp), w2m, Hh, Wh, Cp)

    # BN2-apply + LeakyReLU fused (by XLA) with channel un-pad + NHWC->NCHW.
    scale2, shift2 = _fold_bn(st2, g2p, b2p, cnt)
    a2 = y2.astype(jnp.float32) * scale2 + shift2
    a2 = jnp.where(a2 >= 0.0, a2, LEAKY_SLOPE * a2)
    return jnp.transpose(a2[..., :Co], (0, 3, 1, 2))


# ---------------------------------------------------------------------------
# Pure-JAX reference (same semantics) for a sanity check
# ---------------------------------------------------------------------------
def down_reference(x_nchw, params):
    w1, g1, b1, w2, g2, b2 = (params[k] for k in ("w1", "g1", "b1", "w2", "g2", "b2"))
    x = jnp.transpose(x_nchw, (0, 2, 3, 1)).astype(jnp.float32)
    N, H, W, C = x.shape
    xp = jnp.max(x.reshape(N, H // 2, 2, W // 2, 2, C), axis=(2, 4))

    def conv(z, w9):
        Ci, Co = w9.shape[-2], w9.shape[-1]
        w = w9.reshape(3, 3, Ci, Co)
        return jax.lax.conv_general_dilated(
            z, w, (1, 1), "SAME", dimension_numbers=("NHWC", "HWIO", "NHWC"))

    def bn_lrelu(z, g, b):
        m = jnp.mean(z, axis=(0, 1, 2))
        v = jnp.var(z, axis=(0, 1, 2))
        y = (z - m) / jnp.sqrt(v + BN_EPS) * g + b
        return jnp.where(y >= 0, y, LEAKY_SLOPE * y)

    y = bn_lrelu(conv(xp, w1), g1, b1)
    y = bn_lrelu(conv(y, w2), g2, b2)
    return jnp.transpose(y, (0, 3, 1, 2))


# ---------------------------------------------------------------------------
def make_params(key, cin, cout):
    k1, k2 = jax.random.split(key)
    fan1 = cin * 9
    fan2 = cout * 9
    # conv weights stored as (9, Cin, Cout)  ==  (3,3,Ci,Co) flattened (HWIO)
    w1 = jax.random.normal(k1, (9, cin, cout), jnp.float32) / np.sqrt(fan1)
    w2 = jax.random.normal(k2, (9, cout, cout), jnp.float32) / np.sqrt(fan2)
    g1 = jnp.ones((cout,), jnp.float32)
    b1 = jnp.zeros((cout,), jnp.float32)
    g2 = jnp.ones((cout,), jnp.float32)
    b2 = jnp.zeros((cout,), jnp.float32)
    return dict(w1=w1, g1=g1, b1=b1, w2=w2, g2=g2, b2=b2)


if __name__ == "__main__":
    key = jax.random.PRNGKey(0)
    kx, kp = jax.random.split(key)

    N, CIN, COUT, S = 2, 4, 8, 16
    x = jax.random.normal(kx, (N, CIN, S, S), jnp.float32)      # NCHW like PyTorch
    params = make_params(kp, CIN, COUT)

    down = jax.jit(down_forward)
    out = jax.block_until_ready(down(x, params))
    ref = jax.block_until_ready(down_reference(x, params))

    assert out.shape == (N, COUT, S // 2, S // 2), out.shape
    assert bool(jnp.all(jnp.isfinite(out)))
    # bf16 MXU operands + bf16-stored intermediates (f32 accumulation / stats)
    # -> slightly looser tolerance vs the all-f32 reference.
    np.testing.assert_allclose(np.asarray(out), np.asarray(ref), atol=4e-2, rtol=4e-2)

    print("KERNEL_OK")
</pallas_src>

<mosaic_0001>
module attributes {stable_mosaic.version = 11 : i64} {
  func.func @pool_conv1_kernel(%arg0: i32, %arg1: memref<1x8x2x8x8xbf16, #tpu.memory_space<vmem>>, %arg2: memref<36x128xbf16, #tpu.memory_space<vmem>>, %arg3: memref<1x8x8x128xbf16, #tpu.memory_space<vmem>>, %arg4: memref<1x2x128xf32, #tpu.memory_space<vmem>>, %arg5: memref<10x10x4xf32, #tpu.memory_space<vmem>>) attributes {dimension_semantics = [#tpu.dimension_semantics<parallel>], iteration_bounds = array<i64: 2>, scalar_prefetch = 0 : i64, scratch_operands = 1 : i64, tpu.core_type = #tpu.core_type<tc>, window_params = [{transform_indices = @transform_0, window_bounds = array<i64: 1, 8, 2, 8, 8>}, {pipeline_mode = #tpu.pipeline_mode<synchronous>, transform_indices = @transform_1, window_bounds = array<i64: 36, 128>}, {transform_indices = @transform_2, window_bounds = array<i64: 1, 8, 8, 128>}, {transform_indices = @transform_3, window_bounds = array<i64: 1, 2, 128>}]} {
    %c0 = arith.constant 0 : index
    %c0_0 = arith.constant 0 : index
    %c0_1 = arith.constant 0 : index
    %c0_2 = arith.constant 0 : index
    %c0_3 = arith.constant 0 : index
    %0 = vector.load %arg1[%c0, %c0_0, %c0_1, %c0_2, %c0_3] : memref<1x8x2x8x8xbf16, #tpu.memory_space<vmem>>, vector<1x8x1x8x8xbf16>
    %1 = vector.shape_cast %0 : vector<1x8x1x8x8xbf16> to vector<8x8x8xbf16>
    %c0_4 = arith.constant 0 : index
    %c0_5 = arith.constant 0 : index
    %c1 = arith.constant 1 : index
    %c0_6 = arith.constant 0 : index
    %c0_7 = arith.constant 0 : index
    %2 = vector.load %arg1[%c0_4, %c0_5, %c1, %c0_6, %c0_7] : memref<1x8x2x8x8xbf16, #tpu.memory_space<vmem>>, vector<1x8x1x8x8xbf16>
    %3 = vector.shape_cast %2 : vector<1x8x1x8x8xbf16> to vector<8x8x8xbf16>
    %4 = arith.maximumf %1, %3 : vector<8x8x8xbf16>
    %5 = vector.extract_strided_slice %4 {offsets = [0, 0, 0], sizes = [8, 8, 4], strides = [1, 1, 1]} : vector<8x8x8xbf16> to vector<8x8x4xbf16>
    %6 = vector.extract_strided_slice %4 {offsets = [0, 0, 4], sizes = [8, 8, 4], strides = [1, 1, 1]} : vector<8x8x8xbf16> to vector<8x8x4xbf16>
    %7 = arith.maximumf %5, %6 : vector<8x8x4xbf16>
    %cst = arith.constant 0.000000e+00 : f32
    %8 = vector.broadcast %cst : f32 to vector<1x10x4xf32>
    %c0_8 = arith.constant 0 : index
    %c0_9 = arith.constant 0 : index
    %c0_10 = arith.constant 0 : index
    %9 = vector.load %arg5[%c0_8, %c0_9, %c0_10] : memref<10x10x4xf32, #tpu.memory_space<vmem>>, vector<1x10x4xf32>
    tpu.vector_store %arg5[%c0_8, %c0_9, %c0_10], %8 {strides = array<i32>} : memref<10x10x4xf32, #tpu.memory_space<vmem>>, vector<1x10x4xf32>,
    %cst_11 = arith.constant 0.000000e+00 : f32
    %10 = vector.broadcast %cst_11 : f32 to vector<1x10x4xf32>
    %c9 = arith.constant 9 : index
    %c0_12 = arith.constant 0 : index
    %c0_13 = arith.constant 0 : index
    %11 = vector.load %arg5[%c9, %c0_12, %c0_13] : memref<10x10x4xf32, #tpu.memory_space<vmem>>, vector<1x10x4xf32>
    tpu.vector_store %arg5[%c9, %c0_12, %c0_13], %10 {strides = array<i32>} : memref<10x10x4xf32, #tpu.memory_space<vmem>>, vector<1x10x4xf32>,
    %cst_14 = arith.constant 0.000000e+00 : f32
    %12 = vector.broadcast %cst_14 : f32 to vector<10x1x4xf32>
    %c0_15 = arith.constant 0 : index
    %c0_16 = arith.constant 0 : index
    %c0_17 = arith.constant 0 : index
    %13 = vector.load %arg5[%c0_15, %c0_16, %c0_17] : memref<10x10x4xf32, #tpu.memory_space<vmem>>, vector<10x1x4xf32>
    tpu.vector_store %arg5[%c0_15, %c0_16, %c0_17], %12 {strides = array<i32>} : memref<10x10x4xf32, #tpu.memory_space<vmem>>, vector<10x1x4xf32>,
    %cst_18 = arith.constant 0.000000e+00 : f32
    %14 = vector.broadcast %cst_18 : f32 to vector<10x1x4xf32>
    %c0_19 = arith.constant 0 : index
    %c9_20 = arith.constant 9 : index
    %c0_21 = arith.constant 0 : index
    %15 = vector.load %arg5[%c0_19, %c9_20, %c0_21] : memref<10x10x4xf32, #tpu.memory_space<vmem>>, vector<10x1x4xf32>
    tpu.vector_store %arg5[%c0_19, %c9_20, %c0_21], %14 {strides = array<i32>} : memref<10x10x4xf32, #tpu.memory_space<vmem>>, vector<10x1x4xf32>,
    %16 = arith.extf %7 : vector<8x8x4xbf16> to vector<8x8x4xf32>
    %c1_22 = arith.constant 1 : index
    %c1_23 = arith.constant 1 : index
    %c0_24 = arith.constant 0 : index
    %17 = vector.load %arg5[%c1_22, %c1_23, %c0_24] : memref<10x10x4xf32, #tpu.memory_space<vmem>>, vector<8x8x4xf32>
    tpu.vector_store %arg5[%c1_22, %c1_23, %c0_24], %16 {strides = array<i32>} : memref<10x10x4xf32, #tpu.memory_space<vmem>>, vector<8x8x4xf32>,
    %c0_25 = arith.constant 0 : index
    %c0_26 = arith.constant 0 : index
    %c0_27 = arith.constant 0 : index
    %18 = vector.load %arg5[%c0_25, %c0_26, %c0_27] : memref<10x10x4xf32, #tpu.memory_space<vmem>>, vector<8x8x4xf32>
    %c0_28 = arith.constant 0 : index
    %c1_29 = arith.constant 1 : index
    %c0_30 = arith.constant 0 : index
    %19 = vector.load %arg5[%c0_28, %c1_29, %c0_30] : memref<10x10x4xf32, #tpu.memory_space<vmem>>, vector<8x8x4xf32>
    %c0_31 = arith.constant 0 : index
    %c2 = arith.constant 2 : index
    %c0_32 = arith.constant 0 : index
    %20 = vector.load %arg5[%c0_31, %c2, %c0_32] : memref<10x10x4xf32, #tpu.memory_space<vmem>>, vector<8x8x4xf32>
    %c1_33 = arith.constant 1 : index
    %c0_34 = arith.constant 0 : index
    %c0_35 = arith.constant 0 : index
    %21 = vector.load %arg5[%c1_33, %c0_34, %c0_35] : memref<10x10x4xf32, #tpu.memory_space<vmem>>, vector<8x8x4xf32>
    %c1_36 = arith.constant 1 : index
    %c1_37 = arith.constant 1 : index
    %c0_38 = arith.constant 0 : index
    %22 = vector.load %arg5[%c1_36, %c1_37, %c0_38] : memref<10x10x4xf32, #tpu.memory_space<vmem>>, vector<8x8x4xf32>
    %c1_39 = arith.constant 1 : index
    %c2_40 = arith.constant 2 : index
    %c0_41 = arith.constant 0 : index
    %23 = vector.load %arg5[%c1_39, %c2_40, %c0_41] : memref<10x10x4xf32, #tpu.memory_space<vmem>>, vector<8x8x4xf32>
    %c2_42 = arith.constant 2 : index
    %c0_43 = arith.constant 0 : index
    %c0_44 = arith.constant 0 : index
    %24 = vector.load %arg5[%c2_42, %c0_43, %c0_44] : memref<10x10x4xf32, #tpu.memory_space<vmem>>, vector<8x8x4xf32>
    %c2_45 = arith.constant 2 : index
    %c1_46 = arith.constant 1 : index
    %c0_47 = arith.constant 0 : index
    %25 = vector.load %arg5[%c2_45, %c1_46, %c0_47] : memref<10x10x4xf32, #tpu.memory_space<vmem>>, vector<8x8x4xf32>
    %c2_48 = arith.constant 2 : index
    %c2_49 = arith.constant 2 : index
    %c0_50 = arith.constant 0 : index
    %26 = vector.load %arg5[%c2_48, %c2_49, %c0_50] : memref<10x10x4xf32, #tpu.memory_space<vmem>>, vector<8x8x4xf32>
    %27 = tpu.concatenate %18, %19, %20, %21, %22, %23, %24, %25, %26 in 2 : vector<8x8x4xf32>, vector<8x8x4xf32>, vector<8x8x4xf32>, vector<8x8x4xf32>, vector<8x8x4xf32>, vector<8x8x4xf32>, vector<8x8x4xf32>, vector<8x8x4xf32>, vector<8x8x4xf32> -> vector<8x8x36xf32>
    %28 = vector.shape_cast %27 : vector<8x8x36xf32> to vector<64x36xf32>
    %29 = arith.truncf %28 : vector<64x36xf32> to vector<64x36xbf16>
    %c0_51 = arith.constant 0 : index
    %c0_52 = arith.constant 0 : index
    %30 = vector.load %arg2[%c0_51, %c0_52] : memref<36x128xbf16, #tpu.memory_space<vmem>>, vector<36x128xbf16>
    %cst_53 = arith.constant dense<0.000000e+00> : vector<64x128xf32>
    %31 = tpu.matmul %29, %30, %cst_53 {dimension_numbers = #tpu.dot_dimension_numbers<[1], [0], [0], [1], [0, 0, 1, 1], [], []>} : vector<64x36xbf16>, vector<36x128xbf16>, vector<64x128xf32> -> vector<64x128xf32>
    %32 = vector.shape_cast %31 : vector<64x128xf32> to vector<8x8x128xf32>
    %33 = arith.truncf %32 : vector<8x8x128xf32> to vector<8x8x128xbf16>
    %c0_54 = arith.constant 0 : index
    %c0_55 = arith.constant 0 : index
    %c0_56 = arith.constant 0 : index
    %c0_57 = arith.constant 0 : index
    %34 = vector.load %arg3[%c0_54, %c0_55, %c0_56, %c0_57] : memref<1x8x8x128xbf16, #tpu.memory_space<vmem>>, vector<1x8x8x128xbf16>
    %35 = vector.shape_cast %34 : vector<1x8x8x128xbf16> to vector<8x8x128xbf16>
    %36 = vector.shape_cast %33 : vector<8x8x128xbf16> to vector<1x8x8x128xbf16>
    tpu.vector_store %arg3[%c0_54, %c0_55, %c0_56, %c0_57], %36 {strides = array<i32>} : memref<1x8x8x128xbf16, #tpu.memory_space<vmem>>, vector<1x8x8x128xbf16>,
    %cst_58 = arith.constant dense<0.000000e+00> : vector<128xf32>
    %37 = vector.multi_reduction <add>, %31, %cst_58 [0] : vector<64x128xf32> to vector<128xf32>
    %38 = vector.shape_cast %37 : vector<128xf32> to vector<1x128xf32>
    %39 = arith.mulf %31, %31 : vector<64x128xf32>
    %cst_59 = arith.constant dense<0.000000e+00> : vector<128xf32>
    %40 = vector.multi_reduction <add>, %39, %cst_59 [0] : vector<64x128xf32> to vector<128xf32>
    %41 = vector.shape_cast %40 : vector<128xf32> to vector<1x128xf32>
    %42 = tpu.concatenate %38, %41 in 0 : vector<1x128xf32>, vector<1x128xf32> -> vector<2x128xf32>
    %c0_60 = arith.constant 0 : index
    %c0_61 = arith.constant 0 : index
    %c0_62 = arith.constant 0 : index
    %43 = vector.load %arg4[%c0_60, %c0_61, %c0_62] : memref<1x2x128xf32, #tpu.memory_space<vmem>>, vector<1x2x128xf32>
    %44 = vector.shape_cast %43 : vector<1x2x128xf32> to vector<2x128xf32>
    %45 = vector.shape_cast %42 : vector<2x128xf32> to vector<1x2x128xf32>
    tpu.vector_store %arg4[%c0_60, %c0_61, %c0_62], %45 {strides = array<i32>} : memref<1x2x128xf32, #tpu.memory_space<vmem>>, vector<1x2x128xf32>,
    return
  }
  func.func @transform_0(%arg0: i32) -> (i32, i32, i32, i32, i32) {
    %c0_i32 = arith.constant 0 : i32
    %c0_i32_0 = arith.constant 0 : i32
    %c0_i32_1 = arith.constant 0 : i32
    %c0_i32_2 = arith.constant 0 : i32
    %c0_i32_3 = arith.constant 0 : i32
    return %arg0, %c0_i32, %c0_i32_0, %c0_i32_1, %c0_i32_2 : i32, i32, i32, i32, i32
  }
  func.func @transform_1(%arg0: i32) -> (i32, i32) {
    %c0_i32 = arith.constant 0 : i32
    %c0_i32_0 = arith.constant 0 : i32
    %c0_i32_1 = arith.constant 0 : i32
    return %c0_i32, %c0_i32_0 : i32, i32
  }
  func.func @transform_2(%arg0: i32) -> (i32, i32, i32, i32) {
    %c0_i32 = arith.constant 0 : i32
    %c0_i32_0 = arith.constant 0 : i32
    %c0_i32_1 = arith.constant 0 : i32
    %c0_i32_2 = arith.constant 0 : i32
    return %arg0, %c0_i32, %c0_i32_0, %c0_i32_1 : i32, i32, i32, i32
  }
  func.func @transform_3(%arg0: i32) -> (i32, i32, i32) {
    %c0_i32 = arith.constant 0 : i32
    %c0_i32_0 = arith.constant 0 : i32
    %c0_i32_1 = arith.constant 0 : i32
    return %arg0, %c0_i32, %c0_i32_0 : i32, i32, i32
  }
}

module attributes {stable_mosaic.version = 11 : i64} {
  func.func @bn_act_conv2_kernel(%arg0: i32, %arg1: memref<1x8x8x128xbf16, #tpu.memory_space<vmem>>, %arg2: memref<1x1x1x128xf32, #tpu.memory_space<vmem>>, %arg3: memref<1x1x1x128xf32, #tpu.memory_space<vmem>>, %arg4: memref<9x128x128xbf16, #tpu.memory_space<vmem>>, %arg5: memref<1x8x8x128xbf16, #tpu.memory_space<vmem>>, %arg6: memref<1x2x128xf32, #tpu.memory_space<vmem>>, %arg7: memref<10x10x128xf32, #tpu.memory_space<vmem>>) attributes {dimension_semantics = [#tpu.dimension_semantics<parallel>], iteration_bounds = array<i64: 2>, scalar_prefetch = 0 : i64, scratch_operands = 1 : i64, tpu.core_type = #tpu.core_type<tc>, window_params = [{transform_indices = @transform_0, window_bounds = array<i64: 1, 8, 8, 128>}, {pipeline_mode = #tpu.pipeline_mode<synchronous>, transform_indices = @transform_1, window_bounds = array<i64: 1, 1, 1, 128>}, {pipeline_mode = #tpu.pipeline_mode<synchronous>, transform_indices = @transform_2, window_bounds = array<i64: 1, 1, 1, 128>}, {pipeline_mode = #tpu.pipeline_mode<synchronous>, transform_indices = @transform_3, window_bounds = array<i64: 9, 128, 128>}, {transform_indices = @transform_4, window_bounds = array<i64: 1, 8, 8, 128>}, {transform_indices = @transform_5, window_bounds = array<i64: 1, 2, 128>}]} {
    %c0 = arith.constant 0 : index
    %c0_0 = arith.constant 0 : index
    %c0_1 = arith.constant 0 : index
    %c0_2 = arith.constant 0 : index
    %0 = vector.load %arg1[%c0, %c0_0, %c0_1, %c0_2] : memref<1x8x8x128xbf16, #tpu.memory_space<vmem>>, vector<1x8x8x128xbf16>
    %1 = arith.extf %0 : vector<1x8x8x128xbf16> to vector<1x8x8x128xf32>
    %c0_3 = arith.constant 0 : index
    %c0_4 = arith.constant 0 : index
    %c0_5 = arith.constant 0 : index
    %c0_6 = arith.constant 0 : index
    %2 = vector.load %arg2[%c0_3, %c0_4, %c0_5, %c0_6] : memref<1x1x1x128xf32, #tpu.memory_space<vmem>>, vector<1x1x1x128xf32>
    %3 = vector.broadcast %2 : vector<1x1x1x128xf32> to vector<1x8x8x128xf32>
    %4 = arith.mulf %1, %3 : vector<1x8x8x128xf32>
    %c0_7 = arith.constant 0 : index
    %c0_8 = arith.constant 0 : index
    %c0_9 = arith.constant 0 : index
    %c0_10 = arith.constant 0 : index
    %5 = vector.load %arg3[%c0_7, %c0_8, %c0_9, %c0_10] : memref<1x1x1x128xf32, #tpu.memory_space<vmem>>, vector<1x1x1x128xf32>
    %6 = vector.broadcast %5 : vector<1x1x1x128xf32> to vector<1x8x8x128xf32>
    %7 = arith.addf %4, %6 : vector<1x8x8x128xf32>
    %cst = arith.constant 0.000000e+00 : f32
    %8 = vector.broadcast %cst : f32 to vector<1x8x8x128xf32>
    %9 = arith.cmpf oge, %7, %8 : vector<1x8x8x128xf32>
    %cst_11 = arith.constant 0.00999999977 : f32
    %10 = vector.broadcast %cst_11 : f32 to vector<1x8x8x128xf32>
    %11 = arith.mulf %10, %7 : vector<1x8x8x128xf32>
    %12 = arith.select %9, %7, %11 : vector<1x8x8x128xi1>, vector<1x8x8x128xf32>
    %cst_12 = arith.constant 0.000000e+00 : f32
    %13 = vector.broadcast %cst_12 : f32 to vector<1x10x128xf32>
    %c0_13 = arith.constant 0 : index
    %c0_14 = arith.constant 0 : index
    %c0_15 = arith.constant 0 : index
    %14 = vector.load %arg7[%c0_13, %c0_14, %c0_15] : memref<10x10x128xf32, #tpu.memory_space<vmem>>, vector<1x10x128xf32>
    tpu.vector_store %arg7[%c0_13, %c0_14, %c0_15], %13 {strides = array<i32>} : memref<10x10x128xf32, #tpu.memory_space<vmem>>, vector<1x10x128xf32>,
    %cst_16 = arith.constant 0.000000e+00 : f32
    %15 = vector.broadcast %cst_16 : f32 to vector<1x10x128xf32>
    %c9 = arith.constant 9 : index
    %c0_17 = arith.constant 0 : index
    %c0_18 = arith.constant 0 : index
    %16 = vector.load %arg7[%c9, %c0_17, %c0_18] : memref<10x10x128xf32, #tpu.memory_space<vmem>>, vector<1x10x128xf32>
    tpu.vector_store %arg7[%c9, %c0_17, %c0_18], %15 {strides = array<i32>} : memref<10x10x128xf32, #tpu.memory_space<vmem>>, vector<1x10x128xf32>,
    %cst_19 = arith.constant 0.000000e+00 : f32
    %17 = vector.broadcast %cst_19 : f32 to vector<10x1x128xf32>
    %c0_20 = arith.constant 0 : index
    %c0_21 = arith.constant 0 : index
    %c0_22 = arith.constant 0 : index
    %18 = vector.load %arg7[%c0_20, %c0_21, %c0_22] : memref<10x10x128xf32, #tpu.memory_space<vmem>>, vector<10x1x128xf32>
    tpu.vector_store %arg7[%c0_20, %c0_21, %c0_22], %17 {strides = array<i32>} : memref<10x10x128xf32, #tpu.memory_space<vmem>>, vector<10x1x128xf32>,
    %cst_23 = arith.constant 0.000000e+00 : f32
    %19 = vector.broadcast %cst_23 : f32 to vector<10x1x128xf32>
    %c0_24 = arith.constant 0 : index
    %c9_25 = arith.constant 9 : index
    %c0_26 = arith.constant 0 : index
    %20 = vector.load %arg7[%c0_24, %c9_25, %c0_26] : memref<10x10x128xf32, #tpu.memory_space<vmem>>, vector<10x1x128xf32>
    tpu.vector_store %arg7[%c0_24, %c9_25, %c0_26], %19 {strides = array<i32>} : memref<10x10x128xf32, #tpu.memory_space<vmem>>, vector<10x1x128xf32>,
    %21 = vector.shape_cast %12 : vector<1x8x8x128xf32> to vector<8x8x128xf32>
    %c1 = arith.constant 1 : index
    %c1_27 = arith.constant 1 : index
    %c0_28 = arith.constant 0 : index
    %22 = vector.load %arg7[%c1, %c1_27, %c0_28] : memref<10x10x128xf32, #tpu.memory_space<vmem>>, vector<8x8x128xf32>
    tpu.vector_store %arg7[%c1, %c1_27, %c0_28], %21 {strides = array<i32>} : memref<10x10x128xf32, #tpu.memory_space<vmem>>, vector<8x8x128xf32>,
    %c0_29 = arith.constant 0 : index
    %c0_30 = arith.constant 0 : index
    %c0_31 = arith.constant 0 : index
    %23 = vector.load %arg7[%c0_29, %c0_30, %c0_31] : memref<10x10x128xf32, #tpu.memory_space<vmem>>, vector<8x8x128xf32>
    %24 = vector.shape_cast %23 : vector<8x8x128xf32> to vector<64x128xf32>
    %25 = arith.truncf %24 : vector<64x128xf32> to vector<64x128xbf16>
    %c0_32 = arith.constant 0 : index
    %c0_33 = arith.constant 0 : index
    %c0_34 = arith.constant 0 : index
    %26 = vector.load %arg4[%c0_32, %c0_33, %c0_34] : memref<9x128x128xbf16, #tpu.memory_space<vmem>>, vector<1x128x128xbf16>
    %27 = vector.shape_cast %26 : vector<1x128x128xbf16> to vector<128x128xbf16>
    %cst_35 = arith.constant dense<0.000000e+00> : vector<64x128xf32>
    %28 = tpu.matmul %25, %27, %cst_35 {dimension_numbers = #tpu.dot_dimension_numbers<[1], [0], [0], [1], [0, 0, 1, 1], [], []>} : vector<64x128xbf16>, vector<128x128xbf16>, vector<64x128xf32> -> vector<64x128xf32>
    %c0_36 = arith.constant 0 : index
    %c1_37 = arith.constant 1 : index
    %c0_38 = arith.constant 0 : index
    %29 = vector.load %arg7[%c0_36, %c1_37, %c0_38] : memref<10x10x128xf32, #tpu.memory_space<vmem>>, vector<8x8x128xf32>
    %30 = vector.shape_cast %29 : vector<8x8x128xf32> to vector<64x128xf32>
    %31 = arith.truncf %30 : vector<64x128xf32> to vector<64x128xbf16>
    %c1_39 = arith.constant 1 : index
    %c0_40 = arith.constant 0 : index
    %c0_41 = arith.constant 0 : index
    %32 = vector.load %arg4[%c1_39, %c0_40, %c0_41] : memref<9x128x128xbf16, #tpu.memory_space<vmem>>, vector<1x128x128xbf16>
    %33 = vector.shape_cast %32 : vector<1x128x128xbf16> to vector<128x128xbf16>
    %cst_42 = arith.constant dense<0.000000e+00> : vector<64x128xf32>
    %34 = tpu.matmul %31, %33, %cst_42 {dimension_numbers = #tpu.dot_dimension_numbers<[1], [0], [0], [1], [0, 0, 1, 1], [], []>} : vector<64x128xbf16>, vector<128x128xbf16>, vector<64x128xf32> -> vector<64x128xf32>
    %35 = arith.addf %28, %34 : vector<64x128xf32>
    %c0_43 = arith.constant 0 : index
    %c2 = arith.constant 2 : index
    %c0_44 = arith.constant 0 : index
    %36 = vector.load %arg7[%c0_43, %c2, %c0_44] : memref<10x10x128xf32, #tpu.memory_space<vmem>>, vector<8x8x128xf32>
    %37 = vector.shape_cast %36 : vector<8x8x128xf32> to vector<64x128xf32>
    %38 = arith.truncf %37 : vector<64x128xf32> to vector<64x128xbf16>
    %c2_45 = arith.constant 2 : index
    %c0_46 = arith.constant 0 : index
    %c0_47 = arith.constant 0 : index
    %39 = vector.load %arg4[%c2_45, %c0_46, %c0_47] : memref<9x128x128xbf16, #tpu.memory_space<vmem>>, vector<1x128x128xbf16>
    %40 = vector.shape_cast %39 : vector<1x128x128xbf16> to vector<128x128xbf16>
    %cst_48 = arith.constant dense<0.000000e+00> : vector<64x128xf32>
    %41 = tpu.matmul %38, %40, %cst_48 {dimension_numbers = #tpu.dot_dimension_numbers<[1], [0], [0], [1], [0, 0, 1, 1], [], []>} : vector<64x128xbf16>, vector<128x128xbf16>, vector<64x128xf32> -> vector<64x128xf32>
    %42 = arith.addf %35, %41 : vector<64x128xf32>
    %c1_49 = arith.constant 1 : index
    %c0_50 = arith.constant 0 : index
    %c0_51 = arith.constant 0 : index
    %43 = vector.load %arg7[%c1_49, %c0_50, %c0_51] : memref<10x10x128xf32, #tpu.memory_space<vmem>>, vector<8x8x128xf32>
    %44 = vector.shape_cast %43 : vector<8x8x128xf32> to vector<64x128xf32>
    %45 = arith.truncf %44 : vector<64x128xf32> to vector<64x128xbf16>
    %c3 = arith.constant 3 : index
    %c0_52 = arith.constant 0 : index
    %c0_53 = arith.constant 0 : index
    %46 = vector.load %arg4[%c3, %c0_52, %c0_53] : memref<9x128x128xbf16, #tpu.memory_space<vmem>>, vector<1x128x128xbf16>
    %47 = vector.shape_cast %46 : vector<1x128x128xbf16> to vector<128x128xbf16>
    %cst_54 = arith.constant dense<0.000000e+00> : vector<64x128xf32>
    %48 = tpu.matmul %45, %47, %cst_54 {dimension_numbers = #tpu.dot_dimension_numbers<[1], [0], [0], [1], [0, 0, 1, 1], [], []>} : vector<64x128xbf16>, vector<128x128xbf16>, vector<64x128xf32> -> vector<64x128xf32>
    %49 = arith.addf %42, %48 : vector<64x128xf32>
    %c1_55 = arith.constant 1 : index
    %c1_56 = arith.constant 1 : index
    %c0_57 = arith.constant 0 : index
    %50 = vector.load %arg7[%c1_55, %c1_56, %c0_57] : memref<10x10x128xf32, #tpu.memory_space<vmem>>, vector<8x8x128xf32>
    %51 = vector.shape_cast %50 : vector<8x8x128xf32> to vector<64x128xf32>
    %52 = arith.truncf %51 : vector<64x128xf32> to vector<64x128xbf16>
    %c4 = arith.constant 4 : index
    %c0_58 = arith.constant 0 : index
    %c0_59 = arith.constant 0 : index
    %53 = vector.load %arg4[%c4, %c0_58, %c0_59] : memref<9x128x128xbf16, #tpu.memory_space<vmem>>, vector<1x128x128xbf16>
    %54 = vector.shape_cast %53 : vector<1x128x128xbf16> to vector<128x128xbf16>
    %cst_60 = arith.constant dense<0.000000e+00> : vector<64x128xf32>
    %55 = tpu.matmul %52, %54, %cst_60 {dimension_numbers = #tpu.dot_dimension_numbers<[1], [0], [0], [1], [0, 0, 1, 1], [], []>} : vector<64x128xbf16>, vector<128x128xbf16>, vector<64x128xf32> -> vector<64x128xf32>
    %56 = arith.addf %49, %55 : vector<64x128xf32>
    %c1_61 = arith.constant 1 : index
    %c2_62 = arith.constant 2 : index
    %c0_63 = arith.constant 0 : index
    %57 = vector.load %arg7[%c1_61, %c2_62, %c0_63] : memref<10x10x128xf32, #tpu.memory_space<vmem>>, vector<8x8x128xf32>
    %58 = vector.shape_cast %57 : vector<8x8x128xf32> to vector<64x128xf32>
    %59 = arith.truncf %58 : vector<64x128xf32> to vector<64x128xbf16>
    %c5 = arith.constant 5 : index
    %c0_64 = arith.constant 0 : index
    %c0_65 = arith.constant 0 : index
    %60 = vector.load %arg4[%c5, %c0_64, %c0_65] : memref<9x128x128xbf16, #tpu.memory_space<vmem>>, vector<1x128x128xbf16>
    %61 = vector.shape_cast %60 : vector<1x128x128xbf16> to vector<128x128xbf16>
    %cst_66 = arith.constant dense<0.000000e+00> : vector<64x128xf32>
    %62 = tpu.matmul %59, %61, %cst_66 {dimension_numbers = #tpu.dot_dimension_numbers<[1], [0], [0], [1], [0, 0, 1, 1], [], []>} : vector<64x128xbf16>, vector<128x128xbf16>, vector<64x128xf32> -> vector<64x128xf32>
    %63 = arith.addf %56, %62 : vector<64x128xf32>
    %c2_67 = arith.constant 2 : index
    %c0_68 = arith.constant 0 : index
    %c0_69 = arith.constant 0 : index
    %64 = vector.load %arg7[%c2_67, %c0_68, %c0_69] : memref<10x10x128xf32, #tpu.memory_space<vmem>>, vector<8x8x128xf32>
    %65 = vector.shape_cast %64 : vector<8x8x128xf32> to vector<64x128xf32>
    %66 = arith.truncf %65 : vector<64x128xf32> to vector<64x128xbf16>
    %c6 = arith.constant 6 : index
    %c0_70 = arith.constant 0 : index
    %c0_71 = arith.constant 0 : index
    %67 = vector.load %arg4[%c6, %c0_70, %c0_71] : memref<9x128x128xbf16, #tpu.memory_space<vmem>>, vector<1x128x128xbf16>
    %68 = vector.shape_cast %67 : vector<1x128x128xbf16> to vector<128x128xbf16>
    %cst_72 = arith.constant dense<0.000000e+00> : vector<64x128xf32>
    %69 = tpu.matmul %66, %68, %cst_72 {dimension_numbers = #tpu.dot_dimension_numbers<[1], [0], [0], [1], [0, 0, 1, 1], [], []>} : vector<64x128xbf16>, vector<128x128xbf16>, vector<64x128xf32> -> vector<64x128xf32>
    %70 = arith.addf %63, %69 : vector<64x128xf32>
    %c2_73 = arith.constant 2 : index
    %c1_74 = arith.constant 1 : index
    %c0_75 = arith.constant 0 : index
    %71 = vector.load %arg7[%c2_73, %c1_74, %c0_75] : memref<10x10x128xf32, #tpu.memory_space<vmem>>, vector<8x8x128xf32>
    %72 = vector.shape_cast %71 : vector<8x8x128xf32> to vector<64x128xf32>
    %73 = arith.truncf %72 : vector<64x128xf32> to vector<64x128xbf16>
    %c7 = arith.constant 7 : index
    %c0_76 = arith.constant 0 : index
    %c0_77 = arith.constant 0 : index
    %74 = vector.load %arg4[%c7, %c0_76, %c0_77] : memref<9x128x128xbf16, #tpu.memory_space<vmem>>, vector<1x128x128xbf16>
    %75 = vector.shape_cast %74 : vector<1x128x128xbf16> to vector<128x128xbf16>
    %cst_78 = arith.constant dense<0.000000e+00> : vector<64x128xf32>
    %76 = tpu.matmul %73, %75, %cst_78 {dimension_numbers = #tpu.dot_dimension_numbers<[1], [0], [0], [1], [0, 0, 1, 1], [], []>} : vector<64x128xbf16>, vector<128x128xbf16>, vector<64x128xf32> -> vector<64x128xf32>
    %77 = arith.addf %70, %76 : vector<64x128xf32>
    %c2_79 = arith.constant 2 : index
    %c2_80 = arith.constant 2 : index
    %c0_81 = arith.constant 0 : index
    %78 = vector.load %arg7[%c2_79, %c2_80, %c0_81] : memref<10x10x128xf32, #tpu.memory_space<vmem>>, vector<8x8x128xf32>
    %79 = vector.shape_cast %78 : vector<8x8x128xf32> to vector<64x128xf32>
    %80 = arith.truncf %79 : vector<64x128xf32> to vector<64x128xbf16>
    %c8 = arith.constant 8 : index
    %c0_82 = arith.constant 0 : index
    %c0_83 = arith.constant 0 : index
    %81 = vector.load %arg4[%c8, %c0_82, %c0_83] : memref<9x128x128xbf16, #tpu.memory_space<vmem>>, vector<1x128x128xbf16>
    %82 = vector.shape_cast %81 : vector<1x128x128xbf16> to vector<128x128xbf16>
    %cst_84 = arith.constant dense<0.000000e+00> : vector<64x128xf32>
    %83 = tpu.matmul %80, %82, %cst_84 {dimension_numbers = #tpu.dot_dimension_numbers<[1], [0], [0], [1], [0, 0, 1, 1], [], []>} : vector<64x128xbf16>, vector<128x128xbf16>, vector<64x128xf32> -> vector<64x128xf32>
    %84 = arith.addf %77, %83 : vector<64x128xf32>
    %85 = vector.shape_cast %84 : vector<64x128xf32> to vector<8x8x128xf32>
    %86 = arith.truncf %85 : vector<8x8x128xf32> to vector<8x8x128xbf16>
    %c0_85 = arith.constant 0 : index
    %c0_86 = arith.constant 0 : index
    %c0_87 = arith.constant 0 : index
    %c0_88 = arith.constant 0 : index
    %87 = vector.load %arg5[%c0_85, %c0_86, %c0_87, %c0_88] : memref<1x8x8x128xbf16, #tpu.memory_space<vmem>>, vector<1x8x8x128xbf16>
    %88 = vector.shape_cast %87 : vector<1x8x8x128xbf16> to vector<8x8x128xbf16>
    %89 = vector.shape_cast %86 : vector<8x8x128xbf16> to vector<1x8x8x128xbf16>
    tpu.vector_store %arg5[%c0_85, %c0_86, %c0_87, %c0_88], %89 {strides = array<i32>} : memref<1x8x8x128xbf16, #tpu.memory_space<vmem>>, vector<1x8x8x128xbf16>,
    %cst_89 = arith.constant dense<0.000000e+00> : vector<128xf32>
    %90 = vector.multi_reduction <add>, %84, %cst_89 [0] : vector<64x128xf32> to vector<128xf32>
    %91 = vector.shape_cast %90 : vector<128xf32> to vector<1x128xf32>
    %92 = arith.mulf %84, %84 : vector<64x128xf32>
    %cst_90 = arith.constant dense<0.000000e+00> : vector<128xf32>
    %93 = vector.multi_reduction <add>, %92, %cst_90 [0] : vector<64x128xf32> to vector<128xf32>
    %94 = vector.shape_cast %93 : vector<128xf32> to vector<1x128xf32>
    %95 = tpu.concatenate %91, %94 in 0 : vector<1x128xf32>, vector<1x128xf32> -> vector<2x128xf32>
    %c0_91 = arith.constant 0 : index
    %c0_92 = arith.constant 0 : index
    %c0_93 = arith.constant 0 : index
    %96 = vector.load %arg6[%c0_91, %c0_92, %c0_93] : memref<1x2x128xf32, #tpu.memory_space<vmem>>, vector<1x2x128xf32>
    %97 = vector.shape_cast %96 : vector<1x2x128xf32> to vector<2x128xf32>
    %98 = vector.shape_cast %95 : vector<2x128xf32> to vector<1x2x128xf32>
    tpu.vector_store %arg6[%c0_91, %c0_92, %c0_93], %98 {strides = array<i32>} : memref<1x2x128xf32, #tpu.memory_space<vmem>>, vector<1x2x128xf32>,
    return
  }
  func.func @transform_0(%arg0: i32) -> (i32, i32, i32, i32) {
    %c0_i32 = arith.constant 0 : i32
    %c0_i32_0 = arith.constant 0 : i32
    %c0_i32_1 = arith.constant 0 : i32
    %c0_i32_2 = arith.constant 0 : i32
    return %arg0, %c0_i32, %c0_i32_0, %c0_i32_1 : i32, i32, i32, i32
  }
  func.func @transform_1(%arg0: i32) -> (i32, i32, i32, i32) {
    %c0_i32 = arith.constant 0 : i32
    %c0_i32_0 = arith.constant 0 : i32
    %c0_i32_1 = arith.constant 0 : i32
    %c0_i32_2 = arith.constant 0 : i32
    %c0_i32_3 = arith.constant 0 : i32
    return %c0_i32, %c0_i32_0, %c0_i32_1, %c0_i32_2 : i32, i32, i32, i32
  }
  func.func @transform_2(%arg0: i32) -> (i32, i32, i32, i32) {
    %c0_i32 = arith.constant 0 : i32
    %c0_i32_0 = arith.constant 0 : i32
    %c0_i32_1 = arith.constant 0 : i32
    %c0_i32_2 = arith.constant 0 : i32
    %c0_i32_3 = arith.constant 0 : i32
    return %c0_i32, %c0_i32_0, %c0_i32_1, %c0_i32_2 : i32, i32, i32, i32
  }
  func.func @transform_3(%arg0: i32) -> (i32, i32, i32) {
    %c0_i32 = arith.constant 0 : i32
    %c0_i32_0 = arith.constant 0 : i32
    %c0_i32_1 = arith.constant 0 : i32
    %c0_i32_2 = arith.constant 0 : i32
    return %c0_i32, %c0_i32_0, %c0_i32_1 : i32, i32, i32
  }
  func.func @transform_4(%arg0: i32) -> (i32, i32, i32, i32) {
    %c0_i32 = arith.constant 0 : i32
    %c0_i32_0 = arith.constant 0 : i32
    %c0_i32_1 = arith.constant 0 : i32
    %c0_i32_2 = arith.constant 0 : i32
    return %arg0, %c0_i32, %c0_i32_0, %c0_i32_1 : i32, i32, i32, i32
  }
  func.func @transform_5(%arg0: i32) -> (i32, i32, i32) {
    %c0_i32 = arith.constant 0 : i32
    %c0_i32_0 = arith.constant 0 : i32
    %c0_i32_1 = arith.constant 0 : i32
    return %arg0, %c0_i32, %c0_i32_0 : i32, i32, i32
  }
}

</mosaic_0001>

<llo_original>
// kernel: down_forward.2
$region0: #{down_forward.2}
  #allocation0 [shape = 'u32[]', space=smem, size = 0x4, offset = 0x4, fixed_abs, tag = 'smem constant byte address 0x4 - core index']
  #allocation1 [shape = 'u32[144,128]{1,0:T(1,128)}', space=vmem, size = 0x12000, scoped, tag = 'internal scratch']
  #allocation2 [shape = 'f32[10,10,4]{2,1,0:T(8,128)}', space=vmem, size = 0x14000, scoped, tag = 'scratch operand']
  %s0 = inlined_call_operand.vmem [shape: bf16[2,8,2,8,8], index: 0, kind: input, shape index: {}]
  %s1 = inlined_call_operand.vmem [shape: bf16[36,128], index: 1, kind: input, shape index: {}]
  %s2 = inlined_call_operand.vmem [shape: bf16[2,8,8,128], index: 2, kind: output, shape index: {0}]
  %s3 = inlined_call_operand.vmem [shape: f32[2,2,128], index: 3, kind: output, shape index: {1}]
  %4 = xla_tuple %s2, %s3
  %s5 = sld [smem:[#allocation0]]
  $region49: #{down_forward.2} parent=0
    _
  %s7 = ssub.s32 1, %s5
  %s8 = scalar_select 0, %s7, %s5
  loop: start=0, step=1, limit=4
  $region2: #{down_forward.2} parent=0 // loop_pre_header
    _
  $region3: #{down_forward.2} parent=0 // loop_header
    %s10 = sphi 0, %s14
    %p11 = scmp.ge.s32.totalorder %s10, 4
    %s20 = sphi 0, %s22
    %s23 = sphi 0, %s20
    %s24 = sphi 0, %s23
    %s40 = sphi 0, %s24
    %s44 = sphi 0, %s44
    %s46 = sphi 0, %s44
    %s47 = sphi 0, %s46
    %s61 = sphi 0, %s47
    %s67 = sphi 0, %s69
    %s70 = sphi 0, %s67
    %s71 = sphi 0, %s70
    %s87 = sphi 0, %s71
    %s93 = sphi 0, %s95
    %s96 = sphi 0, %s93
    %s97 = sphi 0, %s96
    %s113 = sphi 0, %s97
  $region4: #{down_forward.2} parent=0 // loop_header_branch
    %13 = sbr.rel (%p11) target = $region8
  $region5: #{down_forward.2} parent=0 // loop_body
    %s15 = ssub.s32 %s10, 1
    %s16 = ssub.s32 %s10, 2
    %s17 = sadd.s32 %s10, 1
    %s18 = ssub.s32 %s10, %s17
    %p19 = scmp.eq.s32.totalorder %s18, 0
    %s21 = sadd.s32 %s20, 1
    %s22 = scalar_select %p19, %s20, %s21
    %p25 = pneg %p19
    %p26 = scmp.eq.s32.totalorder %s10, 1
    %p27 = por %p25, %p26
    %p28 = scmp.ne.s32.totalorder %s20, %s23
    %p29 = scmp.eq.s32.totalorder %s10, 0
    %p30 = por %p28, %p29
    %p31 = scmp.ne.s32.totalorder %s20, %s23
    %p32 = scmp.eq.s32.totalorder %s15, 1
    %p33 = por %p31, %p32
    %p34 = scmp.ne.s32.totalorder %s23, %s24
    %p35 = scmp.eq.s32.totalorder %s15, 0
    %p36 = por %p34, %p35
    %p37 = scmp.ne.s32.totalorder %s23, %s24
    %p38 = scmp.eq.s32.totalorder %s16, 1
    %p39 = por %p37, %p38
    %p41 = scmp.ne.s32.totalorder %s24, %s40
    %p42 = scmp.eq.s32.totalorder %s16, 0
    %p43 = por %p41, %p42
    %s45 = sadd.s32 %s44, 1
    %p48 = scmp.eq.s32.totalorder %s10, 1
    %p49 = scmp.ne.s32.totalorder %s44, %s46
    %p50 = scmp.eq.s32.totalorder %s10, 0
    %p51 = por %p49, %p50
    %p52 = scmp.ne.s32.totalorder %s44, %s46
    %p53 = scmp.eq.s32.totalorder %s15, 1
    %p54 = por %p52, %p53
    %p55 = scmp.ne.s32.totalorder %s46, %s47
    %p56 = scmp.eq.s32.totalorder %s15, 0
    %p57 = por %p55, %p56
    %p58 = scmp.ne.s32.totalorder %s46, %s47
    %p59 = scmp.eq.s32.totalorder %s16, 1
    %p60 = por %p58, %p59
    %p62 = scmp.ne.s32.totalorder %s47, %s61
    %p63 = scmp.eq.s32.totalorder %s16, 0
    %p64 = por %p62, %p63
    %s65 = ssub.s32 %s10, %s17
    %p66 = scmp.eq.s32.totalorder %s65, 0
    %s68 = sadd.s32 %s67, 1
    %s69 = scalar_select %p66, %s67, %s68
    %p72 = pneg %p66
    %p73 = scmp.eq.s32.totalorder %s10, 1
    %p74 = por %p72, %p73
    %p75 = scmp.ne.s32.totalorder %s67, %s70
    %p76 = scmp.eq.s32.totalorder %s10, 0
    %p77 = por %p75, %p76
    %p78 = scmp.ne.s32.totalorder %s67, %s70
    %p79 = scmp.eq.s32.totalorder %s15, 1
    %p80 = por %p78, %p79
    %p81 = scmp.ne.s32.totalorder %s70, %s71
    %p82 = scmp.eq.s32.totalorder %s15, 0
    %p83 = por %p81, %p82
    %p84 = scmp.ne.s32.totalorder %s70, %s71
    %p85 = scmp.eq.s32.totalorder %s16, 1
    %p86 = por %p84, %p85
    %p88 = scmp.ne.s32.totalorder %s71, %s87
    %p89 = scmp.eq.s32.totalorder %s16, 0
    %p90 = por %p88, %p89
    %s91 = ssub.s32 %s10, %s17
    %p92 = scmp.eq.s32.totalorder %s91, 0
    %s94 = sadd.s32 %s93, 1
    %s95 = scalar_select %p92, %s93, %s94
    %p98 = pneg %p92
    %p99 = scmp.eq.s32.totalorder %s10, 1
    %p100 = por %p98, %p99
    %p101 = scmp.ne.s32.totalorder %s93, %s96
    %p102 = scmp.eq.s32.totalorder %s10, 0
    %p103 = por %p101, %p102
    %p104 = scmp.ne.s32.totalorder %s93, %s96
    %p105 = scmp.eq.s32.totalorder %s15, 1
    %p106 = por %p104, %p105
    %p107 = scmp.ne.s32.totalorder %s96, %s97
    %p108 = scmp.eq.s32.totalorder %s15, 0
    %p109 = por %p107, %p108
    %p110 = scmp.ne.s32.totalorder %s96, %s97
    %p111 = scmp.eq.s32.totalorder %s16, 1
    %p112 = por %p110, %p111
    %p114 = scmp.ne.s32.totalorder %s97, %s113
    %p115 = scmp.eq.s32.totalorder %s16, 0
    %p116 = por %p114, %p115
    %p117 = scmp.le.s32.totalorder 1, %s10
    %p118 = scmp.lt.s32.totalorder %s10, 3
    %p119 = pnand %p117, %p118
    %p120 = pneg %p119
    // Predicated region
    $region9: #{down_forward.2} parent=5 // pred_check
      _
    $region10: #{down_forward.2} parent=5 // pred_check_branch
      %122 = sbr.rel (%p119) target = $region12
    $region11: #{down_forward.2} parent=5 // pred_region
      %s123 = ssub.s32 %s10, 1
      // Predicated region
      $region13: #{down_forward.2} parent=11 // pred_check
        %p124 = pneg %p57
      $region14: #{down_forward.2} parent=11 // pred_check_branch
        %126 = sbr.rel (%p124) target = $region16
      $region15: #{down_forward.2} parent=11 // pred_region
        _
      $region16: #{down_forward.2} parent=11 // pred_fallthru
        _
    $region12: #{down_forward.2} parent=5 // pred_fallthru
      _
    %p127 = scmp.lt.s32.totalorder %s10, 2
    // Predicated region
    $region17: #{down_forward.2} parent=5 // pred_check
      %p128 = pneg %p127
    $region18: #{down_forward.2} parent=5 // pred_check_branch
      %130 = sbr.rel (%p128) target = $region20
    $region19: #{down_forward.2} parent=5 // pred_region
      // Predicated region
      $region21: #{down_forward.2} parent=19 // pred_check
        %p131 = pneg %p30
      $region22: #{down_forward.2} parent=19 // pred_check_branch
        %133 = sbr.rel (%p131) target = $region24
      $region23: #{down_forward.2} parent=19 // pred_region
        %p134 = scmp.lt.s32.totalorder %s10, 1
        %s135 = scalar_select %p134, %s10, 1
        %s136 = smul.addr %s135, 16
        %s137 = smul.addr %s136, 4
        %s138 = scalar_lea.vmem %s0, %s137
      $region24: #{down_forward.2} parent=19 // pred_fallthru
        _
    $region20: #{down_forward.2} parent=5 // pred_fallthru
      _
    %p139 = scmp.le.s32.totalorder 1, %s10
    %p140 = scmp.lt.s32.totalorder %s10, 3
    %p141 = pnand %p139, %p140
    %p142 = pneg %p141
    // Predicated region
    $region25: #{down_forward.2} parent=5 // pred_check
      _
    $region26: #{down_forward.2} parent=5 // pred_check_branch
      %144 = sbr.rel (%p141) target = $region28
    $region27: #{down_forward.2} parent=5 // pred_region
      %s145 = ssub.s32 %s10, 1
      %p146 = scmp.lt.s32.totalorder %s15, 1
      %s147 = scalar_select %p146, %s15, 1
      %s148 = smul.addr %s147, 16
      %s149 = smul.addr %s148, 4
      %s150 = scalar_lea.vmem %s0, %s149
      %p151 = pneg %p36
      %p152 = pneg %p33
      %p153 = pneg %p57
      %p154 = pneg %p54
      %p155 = pneg %p83
      %p156 = pneg %p80
      %p157 = scmp.lt.s32.totalorder %s15, 1
      %s158 = scalar_select %p157, %s15, 1
      %s159 = smul.addr %s158, 8
      %s160 = smul.addr %s159, 4
      %s161 = scalar_lea.vmem %s2, %s160
      %p162 = pneg %p109
      %p163 = pneg %p106
      %p164 = scmp.lt.s32.totalorder %s15, 1
      %s165 = scalar_select %p164, %s15, 1
      %s166 = smul.addr %s165, 2
      %s167 = scalar_lea.vmem %s3, %s166
      %p168 = scmp.lt.s32.totalorder %s15, 1
      %s169 = scalar_select %p168, %s15, 1
      %s170 = smul.addr %s169, 16
      %s171 = smul.addr %s170, 4
      %s172 = scalar_lea.vmem %s0, %s171
      %p173 = scmp.lt.s32.totalorder %s15, 1
      %s174 = scalar_select %p173, %s15, 1
      %s175 = smul.addr %s174, 8
      %s176 = smul.addr %s175, 4
      %s177 = scalar_lea.vmem %s2, %s176
      %p178 = scmp.lt.s32.totalorder %s15, 1
      %s179 = scalar_select %p178, %s15, 1
      %s180 = smul.addr %s179, 2
      %s181 = scalar_lea.vmem %s3, %s180
      %v183 = vld [vmem:[%s172] sm:$0xf]
      %v184 = vld [vmem:[%s172 + $0x8] sm:$0xf]
      %v185 = vld [vmem:[%s172 + $0x10] sm:$0xf]
      %v186 = vld [vmem:[%s172 + $0x18] sm:$0xf]
      %v187 = vld [vmem:[%s172 + $0x20] sm:$0xf]
      %v188 = vld [vmem:[%s172 + $0x28] sm:$0xf]
      %v189 = vld [vmem:[%s172 + $0x30] sm:$0xf]
      %v190 = vld [vmem:[%s172 + $0x38] sm:$0xf]
      %s191 = scalar_lea.vmem %s172, 4
      %v192 = vld [vmem:[%s191] sm:$0xf]
      %v193 = vld [vmem:[%s191 + $0x8] sm:$0xf]
      %v194 = vld [vmem:[%s191 + $0x10] sm:$0xf]
      %v195 = vld [vmem:[%s191 + $0x18] sm:$0xf]
      %v196 = vld [vmem:[%s191 + $0x20] sm:$0xf]
      %v197 = vld [vmem:[%s191 + $0x28] sm:$0xf]
      %v198 = vld [vmem:[%s191 + $0x30] sm:$0xf]
      %v199 = vld [vmem:[%s191 + $0x38] sm:$0xf]
      %v200 = vmax.bf16 %v183, %v192
      %v201 = vmax.bf16 %v184, %v193
      %v202 = vmax.bf16 %v185, %v194
      %v203 = vmax.bf16 %v186, %v195
      %v204 = vmax.bf16 %v187, %v196
      %v205 = vmax.bf16 %v188, %v197
      %v206 = vmax.bf16 %v189, %v198
      %v207 = vmax.bf16 %v190, %v199
      %216 = vrot.lane.b32.xlu0 %v200, 124
      %v217 = vpop.permute.xlu0 %216
      %218 = vrot.lane.b32.xlu0 %v201, 124
      %v219 = vpop.permute.xlu0 %218
      %220 = vrot.lane.b32.xlu0 %v202, 124
      %v221 = vpop.permute.xlu0 %220
      %222 = vrot.lane.b32.xlu0 %v203, 124
      %v223 = vpop.permute.xlu0 %222
      %224 = vrot.lane.b32.xlu0 %v204, 124
      %v225 = vpop.permute.xlu0 %224
      %226 = vrot.lane.b32.xlu0 %v205, 124
      %v227 = vpop.permute.xlu0 %226
      %228 = vrot.lane.b32.xlu0 %v206, 124
      %v229 = vpop.permute.xlu0 %228
      %230 = vrot.lane.b32.xlu0 %v207, 124
      %v231 = vpop.permute.xlu0 %230
      %v240 = vmax.bf16 %v200, %v217
      %v241 = vmax.bf16 %v201, %v219
      %v242 = vmax.bf16 %v202, %v221
      %v243 = vmax.bf16 %v203, %v223
      %v244 = vmax.bf16 %v204, %v225
      %v245 = vmax.bf16 %v205, %v227
      %v246 = vmax.bf16 %v206, %v229
      %v247 = vmax.bf16 %v207, %v231
      %vm248 = vcmask 31744
      %249 = vst.msk [vmem:[#allocation2] sm:$0xff] %vm248, 0.0
      %vm250 = vcmask 25600
      %251 = vst.msk [vmem:[#allocation2 + $0x8] sm:$0x3] %vm250, 0.0
      %s252 = scalar_lea.vmem [#allocation2], 144
      %253 = vst.msk [vmem:[%s252] sm:$0xff] %vm248, 0.0
      %254 = vst.msk [vmem:[%s252 + $0x8] sm:$0x3] %vm250, 0.0
      %vm255 = vcmask 24576
      %256 = vst.msk [vmem:[#allocation2] sm:$0x1] %vm255, 0.0
      %257 = vst.msk [vmem:[#allocation2 + $0x10] sm:$0x1] %vm255, 0.0
      %258 = vst.msk [vmem:[#allocation2 + $0x20] sm:$0x1] %vm255, 0.0
      %259 = vst.msk [vmem:[#allocation2 + $0x30] sm:$0x1] %vm255, 0.0
      %260 = vst.msk [vmem:[#allocation2 + $0x40] sm:$0x1] %vm255, 0.0
      %261 = vst.msk [vmem:[#allocation2 + $0x50] sm:$0x1] %vm255, 0.0
      %262 = vst.msk [vmem:[#allocation2 + $0x60] sm:$0x1] %vm255, 0.0
      %263 = vst.msk [vmem:[#allocation2 + $0x70] sm:$0x1] %vm255, 0.0
      %264 = vst.msk [vmem:[#allocation2 + $0x80] sm:$0x1] %vm255, 0.0
      %265 = vst.msk [vmem:[#allocation2 + $0x90] sm:$0x1] %vm255, 0.0
      %266 = vst.msk [vmem:[#allocation2 + $0x9] sm:$0x1] %vm255, 0.0
      %267 = vst.msk [vmem:[#allocation2 + $0x19] sm:$0x1] %vm255, 0.0
      %268 = vst.msk [vmem:[#allocation2 + $0x29] sm:$0x1] %vm255, 0.0
      %269 = vst.msk [vmem:[#allocation2 + $0x39] sm:$0x1] %vm255, 0.0
      %270 = vst.msk [vmem:[#allocation2 + $0x49] sm:$0x1] %vm255, 0.0
      %271 = vst.msk [vmem:[#allocation2 + $0x59] sm:$0x1] %vm255, 0.0
      %272 = vst.msk [vmem:[#allocation2 + $0x69] sm:$0x1] %vm255, 0.0
      %273 = vst.msk [vmem:[#allocation2 + $0x79] sm:$0x1] %vm255, 0.0
      %274 = vst.msk [vmem:[#allocation2 + $0x89] sm:$0x1] %vm255, 0.0
      %275 = vst.msk [vmem:[#allocation2 + $0x99] sm:$0x1] %vm255, 0.0
      %v276 = vunpack.c.l.bf16 %v240
      %v277 = vunpack.c.l.bf16 %v241
      %v278 = vunpack.c.l.bf16 %v242
      %v279 = vunpack.c.l.bf16 %v243
      %v280 = vunpack.c.l.bf16 %v244
      %v281 = vunpack.c.l.bf16 %v245
      %v282 = vunpack.c.l.bf16 %v246
      %v283 = vunpack.c.l.bf16 %v247
      %s284 = scalar_lea.vmem [#allocation2], 16
      %285 = vst.msk [vmem:[%s284 + $0x1] sm:$0xff] %vm248, %v276
      %286 = vst.msk [vmem:[%s284 + $0x11] sm:$0xff] %vm248, %v277
      %287 = vst.msk [vmem:[%s284 + $0x21] sm:$0xff] %vm248, %v278
      %288 = vst.msk [vmem:[%s284 + $0x31] sm:$0xff] %vm248, %v279
      %289 = vst.msk [vmem:[%s284 + $0x41] sm:$0xff] %vm248, %v280
      %290 = vst.msk [vmem:[%s284 + $0x51] sm:$0xff] %vm248, %v281
      %291 = vst.msk [vmem:[%s284 + $0x61] sm:$0xff] %vm248, %v282
      %292 = vst.msk [vmem:[%s284 + $0x71] sm:$0xff] %vm248, %v283
      %v293 = vld [vmem:[#allocation2] sm:$0xff]
      %v294 = vld [vmem:[#allocation2 + $0x10] sm:$0xff]
      %v295 = vld [vmem:[#allocation2 + $0x20] sm:$0xff]
      %v296 = vld [vmem:[#allocation2 + $0x30] sm:$0xff]
      %v297 = vld [vmem:[#allocation2 + $0x40] sm:$0xff]
      %v298 = vld [vmem:[#allocation2 + $0x50] sm:$0xff]
      %v299 = vld [vmem:[#allocation2 + $0x60] sm:$0xff]
      %v300 = vld [vmem:[#allocation2 + $0x70] sm:$0xff]
      %v301 = vld [vmem:[#allocation2 + $0x1] sm:$0xff]
      %v302 = vld [vmem:[#allocation2 + $0x11] sm:$0xff]
      %v303 = vld [vmem:[#allocation2 + $0x21] sm:$0xff]
      %v304 = vld [vmem:[#allocation2 + $0x31] sm:$0xff]
      %v305 = vld [vmem:[#allocation2 + $0x41] sm:$0xff]
      %v306 = vld [vmem:[#allocation2 + $0x51] sm:$0xff]
      %v307 = vld [vmem:[#allocation2 + $0x61] sm:$0xff]
      %v308 = vld [vmem:[#allocation2 + $0x71] sm:$0xff]
      %v309 = vld [vmem:[#allocation2 + $0x2] sm:$0xff]
      %v310 = vld [vmem:[#allocation2 + $0x12] sm:$0xff]
      %v311 = vld [vmem:[#allocation2 + $0x22] sm:$0xff]
      %v312 = vld [vmem:[#allocation2 + $0x32] sm:$0xff]
      %v313 = vld [vmem:[#allocation2 + $0x42] sm:$0xff]
      %v314 = vld [vmem:[#allocation2 + $0x52] sm:$0xff]
      %v315 = vld [vmem:[#allocation2 + $0x62] sm:$0xff]
      %v316 = vld [vmem:[#allocation2 + $0x72] sm:$0xff]
      %v317 = vld [vmem:[%s284] sm:$0xff]
      %v318 = vld [vmem:[%s284 + $0x10] sm:$0xff]
      %v319 = vld [vmem:[%s284 + $0x20] sm:$0xff]
      %v320 = vld [vmem:[%s284 + $0x30] sm:$0xff]
      %v321 = vld [vmem:[%s284 + $0x40] sm:$0xff]
      %v322 = vld [vmem:[%s284 + $0x50] sm:$0xff]
      %v323 = vld [vmem:[%s284 + $0x60] sm:$0xff]
      %v324 = vld [vmem:[%s284 + $0x70] sm:$0xff]
      %v325 = vld [vmem:[%s284 + $0x1] sm:$0xff]
      %v326 = vld [vmem:[%s284 + $0x11] sm:$0xff]
      %v327 = vld [vmem:[%s284 + $0x21] sm:$0xff]
      %v328 = vld [vmem:[%s284 + $0x31] sm:$0xff]
      %v329 = vld [vmem:[%s284 + $0x41] sm:$0xff]
      %v330 = vld [vmem:[%s284 + $0x51] sm:$0xff]
      %v331 = vld [vmem:[%s284 + $0x61] sm:$0xff]
      %v332 = vld [vmem:[%s284 + $0x71] sm:$0xff]
      %v333 = vld [vmem:[%s284 + $0x2] sm:$0xff]
      %v334 = vld [vmem:[%s284 + $0x12] sm:$0xff]
      %v335 = vld [vmem:[%s284 + $0x22] sm:$0xff]
      %v336 = vld [vmem:[%s284 + $0x32] sm:$0xff]
      %v337 = vld [vmem:[%s284 + $0x42] sm:$0xff]
      %v338 = vld [vmem:[%s284 + $0x52] sm:$0xff]
      %v339 = vld [vmem:[%s284 + $0x62] sm:$0xff]
      %v340 = vld [vmem:[%s284 + $0x72] sm:$0xff]
      %s341 = scalar_lea.vmem [#allocation2], 32
      %v342 = vld [vmem:[%s341] sm:$0xff]
      %v343 = vld [vmem:[%s341 + $0x10] sm:$0xff]
      %v344 = vld [vmem:[%s341 + $0x20] sm:$0xff]
      %v345 = vld [vmem:[%s341 + $0x30] sm:$0xff]
      %v346 = vld [vmem:[%s341 + $0x40] sm:$0xff]
      %v347 = vld [vmem:[%s341 + $0x50] sm:$0xff]
      %v348 = vld [vmem:[%s341 + $0x60] sm:$0xff]
      %v349 = vld [vmem:[%s341 + $0x70] sm:$0xff]
      %v350 = vld [vmem:[%s341 + $0x1] sm:$0xff]
      %v351 = vld [vmem:[%s341 + $0x11] sm:$0xff]
      %v352 = vld [vmem:[%s341 + $0x21] sm:$0xff]
      %v353 = vld [vmem:[%s341 + $0x31] sm:$0xff]
      %v354 = vld [vmem:[%s341 + $0x41] sm:$0xff]
      %v355 = vld [vmem:[%s341 + $0x51] sm:$0xff]
      %v356 = vld [vmem:[%s341 + $0x61] sm:$0xff]
      %v357 = vld [vmem:[%s341 + $0x71] sm:$0xff]
      %v358 = vld [vmem:[%s341 + $0x2] sm:$0xff]
      %v359 = vld [vmem:[%s341 + $0x12] sm:$0xff]
      %v360 = vld [vmem:[%s341 + $0x22] sm:$0xff]
      %v361 = vld [vmem:[%s341 + $0x32] sm:$0xff]
      %v362 = vld [vmem:[%s341 + $0x42] sm:$0xff]
      %v363 = vld [vmem:[%s341 + $0x52] sm:$0xff]
      %v364 = vld [vmem:[%s341 + $0x62] sm:$0xff]
      %v365 = vld [vmem:[%s341 + $0x72] sm:$0xff]
      %374 = vrot.lane.b32.xlu0 %v301, 4
      %v375 = vpop.permute.xlu0 %374
      %376 = vrot.lane.b32.xlu0 %v302, 4
      %v377 = vpop.permute.xlu0 %376
      %378 = vrot.lane.b32.xlu0 %v303, 4
      %v379 = vpop.permute.xlu0 %378
      %380 = vrot.lane.b32.xlu0 %v304, 4
      %v381 = vpop.permute.xlu0 %380
      %382 = vrot.lane.b32.xlu0 %v305, 4
      %v383 = vpop.permute.xlu0 %382
      %384 = vrot.lane.b32.xlu0 %v306, 4
      %v385 = vpop.permute.xlu0 %384
      %386 = vrot.lane.b32.xlu0 %v307, 4
      %v387 = vpop.permute.xlu0 %386
      %388 = vrot.lane.b32.xlu0 %v308, 4
      %v389 = vpop.permute.xlu0 %388
      %406 = vrot.lane.b32.xlu0 %v309, 8
      %v407 = vpop.permute.xlu0 %406
      %408 = vrot.lane.b32.xlu0 %v310, 8
      %v409 = vpop.permute.xlu0 %408
      %410 = vrot.lane.b32.xlu0 %v311, 8
      %v411 = vpop.permute.xlu0 %410
      %412 = vrot.lane.b32.xlu0 %v312, 8
      %v413 = vpop.permute.xlu0 %412
      %414 = vrot.lane.b32.xlu0 %v313, 8
      %v415 = vpop.permute.xlu0 %414
      %416 = vrot.lane.b32.xlu0 %v314, 8
      %v417 = vpop.permute.xlu0 %416
      %418 = vrot.lane.b32.xlu0 %v315, 8
      %v419 = vpop.permute.xlu0 %418
      %420 = vrot.lane.b32.xlu0 %v316, 8
      %v421 = vpop.permute.xlu0 %420
      %438 = vrot.lane.b32.xlu0 %v317, 12
      %v439 = vpop.permute.xlu0 %438
      %440 = vrot.lane.b32.xlu0 %v318, 12
      %v441 = vpop.permute.xlu0 %440
      %442 = vrot.lane.b32.xlu0 %v319, 12
      %v443 = vpop.permute.xlu0 %442
      %444 = vrot.lane.b32.xlu0 %v320, 12
      %v445 = vpop.permute.xlu0 %444
      %446 = vrot.lane.b32.xlu0 %v321, 12
      %v447 = vpop.permute.xlu0 %446
      %448 = vrot.lane.b32.xlu0 %v322, 12
      %v449 = vpop.permute.xlu0 %448
      %450 = vrot.lane.b32.xlu0 %v323, 12
      %v451 = vpop.permute.xlu0 %450
      %452 = vrot.lane.b32.xlu0 %v324, 12
      %v453 = vpop.permute.xlu0 %452
      %470 = vrot.lane.b32.xlu0 %v325, 16
      %v471 = vpop.permute.xlu0 %470
      %472 = vrot.lane.b32.xlu0 %v326, 16
      %v473 = vpop.permute.xlu0 %472
      %474 = vrot.lane.b32.xlu0 %v327, 16
      %v475 = vpop.permute.xlu0 %474
      %476 = vrot.lane.b32.xlu0 %v328, 16
      %v477 = vpop.permute.xlu0 %476
      %478 = vrot.lane.b32.xlu0 %v329, 16
      %v479 = vpop.permute.xlu0 %478
      %480 = vrot.lane.b32.xlu0 %v330, 16
      %v481 = vpop.permute.xlu0 %480
      %482 = vrot.lane.b32.xlu0 %v331, 16
      %v483 = vpop.permute.xlu0 %482
      %484 = vrot.lane.b32.xlu0 %v332, 16
      %v485 = vpop.permute.xlu0 %484
      %502 = vrot.lane.b32.xlu0 %v333, 20
      %v503 = vpop.permute.xlu0 %502
      %504 = vrot.lane.b32.xlu0 %v334, 20
      %v505 = vpop.permute.xlu0 %504
      %506 = vrot.lane.b32.xlu0 %v335, 20
      %v507 = vpop.permute.xlu0 %506
      %508 = vrot.lane.b32.xlu0 %v336, 20
      %v509 = vpop.permute.xlu0 %508
      %510 = vrot.lane.b32.xlu0 %v337, 20
      %v511 = vpop.permute.xlu0 %510
      %512 = vrot.lane.b32.xlu0 %v338, 20
      %v513 = vpop.permute.xlu0 %512
      %514 = vrot.lane.b32.xlu0 %v339, 20
      %v515 = vpop.permute.xlu0 %514
      %516 = vrot.lane.b32.xlu0 %v340, 20
      %v517 = vpop.permute.xlu0 %516
      %534 = vrot.lane.b32.xlu0 %v342, 24
      %v535 = vpop.permute.xlu0 %534
      %536 = vrot.lane.b32.xlu0 %v343, 24
      %v537 = vpop.permute.xlu0 %536
      %538 = vrot.lane.b32.xlu0 %v344, 24
      %v539 = vpop.permute.xlu0 %538
      %540 = vrot.lane.b32.xlu0 %v345, 24
      %v541 = vpop.permute.xlu0 %540
      %542 = vrot.lane.b32.xlu0 %v346, 24
      %v543 = vpop.permute.xlu0 %542
      %544 = vrot.lane.b32.xlu0 %v347, 24
      %v545 = vpop.permute.xlu0 %544
      %546 = vrot.lane.b32.xlu0 %v348, 24
      %v547 = vpop.permute.xlu0 %546
      %548 = vrot.lane.b32.xlu0 %v349, 24
      %v549 = vpop.permute.xlu0 %548
      %566 = vrot.lane.b32.xlu0 %v350, 28
      %v567 = vpop.permute.xlu0 %566
      %568 = vrot.lane.b32.xlu0 %v351, 28
      %v569 = vpop.permute.xlu0 %568
      %570 = vrot.lane.b32.xlu0 %v352, 28
      %v571 = vpop.permute.xlu0 %570
      %572 = vrot.lane.b32.xlu0 %v353, 28
      %v573 = vpop.permute.xlu0 %572
      %574 = vrot.lane.b32.xlu0 %v354, 28
      %v575 = vpop.permute.xlu0 %574
      %576 = vrot.lane.b32.xlu0 %v355, 28
      %v577 = vpop.permute.xlu0 %576
      %578 = vrot.lane.b32.xlu0 %v356, 28
      %v579 = vpop.permute.xlu0 %578
      %580 = vrot.lane.b32.xlu0 %v357, 28
      %v581 = vpop.permute.xlu0 %580
      %598 = vrot.lane.b32.xlu0 %v358, 32
      %v599 = vpop.permute.xlu0 %598
      %600 = vrot.lane.b32.xlu0 %v359, 32
      %v601 = vpop.permute.xlu0 %600
      %602 = vrot.lane.b32.xlu0 %v360, 32
      %v603 = vpop.permute.xlu0 %602
      %604 = vrot.lane.b32.xlu0 %v361, 32
      %v605 = vpop.permute.xlu0 %604
      %606 = vrot.lane.b32.xlu0 %v362, 32
      %v607 = vpop.permute.xlu0 %606
      %608 = vrot.lane.b32.xlu0 %v363, 32
      %v609 = vpop.permute.xlu0 %608
      %610 = vrot.lane.b32.xlu0 %v364, 32
      %v611 = vpop.permute.xlu0 %610
      %612 = vrot.lane.b32.xlu0 %v365, 32
      %v613 = vpop.permute.xlu0 %612
      %v622 = vsel %vm248, %v293, %v375
      %v623 = vsel %vm248, %v294, %v377
      %v624 = vsel %vm248, %v295, %v379
      %v625 = vsel %vm248, %v296, %v381
      %v626 = vsel %vm248, %v297, %v383
      %v627 = vsel %vm248, %v298, %v385
      %v628 = vsel %vm248, %v299, %v387
      %v629 = vsel %vm248, %v300, %v389
      %vm630 = vcmask 64512
      %v631 = vsel %vm630, %v622, %v407
      %v632 = vsel %vm630, %v623, %v409
      %v633 = vsel %vm630, %v624, %v411
      %v634 = vsel %vm630, %v625, %v413
      %v635 = vsel %vm630, %v626, %v415
      %v636 = vsel %vm630, %v627, %v417
      %v637 = vsel %vm630, %v628, %v419
      %v638 = vsel %vm630, %v629, %v421
      %vm639 = vcmask 97280
      %v640 = vsel %vm639, %v631, %v439
      %v641 = vsel %vm639, %v632, %v441
      %v642 = vsel %vm639, %v633, %v443
      %v643 = vsel %vm639, %v634, %v445
      %v644 = vsel %vm639, %v635, %v447
      %v645 = vsel %vm639, %v636, %v449
      %v646 = vsel %vm639, %v637, %v451
      %v647 = vsel %vm639, %v638, %v453
      %vm648 = vcmask 130048
      %v649 = vsel %vm648, %v640, %v471
      %v650 = vsel %vm648, %v641, %v473
      %v651 = vsel %vm648, %v642, %v475
      %v652 = vsel %vm648, %v643, %v477
      %v653 = vsel %vm648, %v644, %v479
      %v654 = vsel %vm648, %v645, %v481
      %v655 = vsel %vm648, %v646, %v483
      %v656 = vsel %vm648, %v647, %v485
      %vm657 = vcmask 162816
      %v658 = vsel %vm657, %v649, %v503
      %v659 = vsel %vm657, %v650, %v505
      %v660 = vsel %vm657, %v651, %v507
      %v661 = vsel %vm657, %v652, %v509
      %v662 = vsel %vm657, %v653, %v511
      %v663 = vsel %vm657, %v654, %v513
      %v664 = vsel %vm657, %v655, %v515
      %v665 = vsel %vm657, %v656, %v517
      %vm666 = vcmask 195584
      %v667 = vsel %vm666, %v658, %v535
      %v668 = vsel %vm666, %v659, %v537
      %v669 = vsel %vm666, %v660, %v539
      %v670 = vsel %vm666, %v661, %v541
      %v671 = vsel %vm666, %v662, %v543
      %v672 = vsel %vm666, %v663, %v545
      %v673 = vsel %vm666, %v664, %v547
      %v674 = vsel %vm666, %v665, %v549
      %vm675 = vcmask 228352
      %v676 = vsel %vm675, %v667, %v567
      %v677 = vsel %vm675, %v668, %v569
      %v678 = vsel %vm675, %v669, %v571
      %v679 = vsel %vm675, %v670, %v573
      %v680 = vsel %vm675, %v671, %v575
      %v681 = vsel %vm675, %v672, %v577
      %v682 = vsel %vm675, %v673, %v579
      %v683 = vsel %vm675, %v674, %v581
      %vm684 = vcmask 261120
      %v685 = vsel %vm684, %v676, %v599
      %v686 = vsel %vm684, %v677, %v601
      %v687 = vsel %vm684, %v678, %v603
      %v688 = vsel %vm684, %v679, %v605
      %v689 = vsel %vm684, %v680, %v607
      %v690 = vsel %vm684, %v681, %v609
      %v691 = vsel %vm684, %v682, %v611
      %v692 = vsel %vm684, %v683, %v613
      %v693 = vpack.c.bf16 %v686, %v685
      %v694 = vpack.c.bf16 %v688, %v687
      %v695 = vpack.c.bf16 %v690, %v689
      %v696 = vpack.c.bf16 %v692, %v691
      %v697 = vld [vmem:[%s1] sm:$0xf]
      %v698 = vld [vmem:[%s1 + $0x4] sm:$0xf]
      %v699 = vld [vmem:[%s1 + $0x8] sm:$0xf]
      %v700 = vld [vmem:[%s1 + $0xc] sm:$0xf]
      %v701 = vld [vmem:[%s1 + $0x10] sm:$0x3]
      %v707 = vunpack.c.l.b16 %v697
      %v708 = vunpack.c.l.b16 %v698
      %v709 = vunpack.c.l.b16 %v699
      %v710 = vunpack.c.l.b16 %v700
      %v711 = vunpack.c.l.b16 %v701
      %v712 = vpack.c.b16 %v708, %v707
      %v713 = vpack.c.b16 %v710, %v709
      %v714 = vpack.c.b16 %v711, %v711
      %vm717 = vcmask 293888
      %v719 = vsel %vm717, %v693, 0
      %v722 = vsel %vm717, %v694, 0
      %v725 = vsel %vm717, %v695, 0
      %v728 = vsel %vm717, %v696, 0
      %vm730 = vcmask 1041408
      %v732 = vsel %vm730, %v714, 0
      %734 = vmatprep.subr.bf16.mxu0 0
      %735 = vmatpush1.bf16.msra.mxu0 0
      %736 = vmatprep.subr.bf16.mxu0 0
      %737 = vmatpush1.bf16.msra.mxu0 0
      %738 = vmatprep.subr.bf16.mxu0 0
      %739 = vmatpush1.bf16.msra.mxu0 0
      %740 = vmatprep.subr.bf16.mxu0 0
      %741 = vmatpush1.bf16.msra.mxu0 0
      %742 = vmatprep.subr.bf16.mxu0 0
      %743 = vmatpush1.bf16.msra.mxu0 0
      %744 = vmatprep.subr.bf16.mxu0 0
      %745 = vmatpush1.bf16.msra.mxu0 %v732
      %746 = vmatprep.subr.bf16.mxu0 0
      %747 = vmatpush1.bf16.msra.mxu0 %v713
      %748 = vmatprep.subr.bf16.mxu0 0
      %749 = vmatpush1.bf16.msra.mxu0 %v712
      %750 = vmatprep.subr.bf16.mxu0 0
      %751 = vmatpush2.bf16.msra.mxu0 0
      %752 = vmatprep.subr.bf16.mxu0 0
      %753 = vmatpush2.bf16.msra.mxu0 0
      %754 = vmatprep.subr.bf16.mxu0 0
      %755 = vmatpush2.bf16.msra.mxu0 0
      %756 = vmatprep.subr.bf16.mxu0 0
      %757 = vmatpush2.bf16.msra.mxu0 0
      %758 = vmatprep.subr.bf16.mxu0 0
      %759 = vmatpush2.bf16.msra.mxu0 0
      %760 = vmatprep.subr.bf16.mxu0 0
      %761 = vmatpush2.bf16.msra.mxu0 0
      %762 = vmatprep.subr.bf16.mxu0 0
      %763 = vmatpush2.bf16.msra.mxu0 0
      %764 = vmatprep.subr.bf16.mxu0 0
      %765 = vmatpush2.bf16.msra.mxu0 0
      %766 = vmatprep.mubr.bf16.mxu0 0
      %767 = vmatmul.mubr.bf16.gmra.mxu0 %v719
      %v768 = vpop.f32.mrf.mxu0
      %v769 = vadd.f32 0.0, %v768
      %v770 = vpop.f32.mrf.mxu0
      %v771 = vpop.f32.mrf.mxu0
      %v772 = vadd.f32 0.0, %v771
      %v773 = vpop.f32.mrf.mxu0
      %774 = vmatprep.mubr.bf16.mxu0 0
      %775 = vmatmul.mubr.bf16.gmra.mxu0 %v722
      %v776 = vpop.f32.mrf.mxu0
      %v777 = vadd.f32 0.0, %v776
      %v778 = vpop.f32.mrf.mxu0
      %v779 = vpop.f32.mrf.mxu0
      %v780 = vadd.f32 0.0, %v779
      %v781 = vpop.f32.mrf.mxu0
      %782 = vmatprep.mubr.bf16.mxu0 0
      %783 = vmatmul.mubr.bf16.gmra.mxu0 %v725
      %v784 = vpop.f32.mrf.mxu0
      %v785 = vadd.f32 0.0, %v784
      %v786 = vpop.f32.mrf.mxu0
      %v787 = vpop.f32.mrf.mxu0
      %v788 = vadd.f32 0.0, %v787
      %v789 = vpop.f32.mrf.mxu0
      %790 = vmatprep.mubr.bf16.mxu0 0
      %791 = vmatmul.mubr.bf16.gmra.mxu0 %v728
      %v792 = vpop.f32.mrf.mxu0
      %v793 = vadd.f32 0.0, %v792
      %v794 = vpop.f32.mrf.mxu0
      %v795 = vpop.f32.mrf.mxu0
      %v796 = vadd.f32 0.0, %v795
      %v797 = vpop.f32.mrf.mxu0
      %798 = vdwg.mxu0
      %v799 = vpack.c.bf16 %v769, %v769
      %v800 = vpack.c.bf16 %v772, %v772
      %v801 = vpack.c.bf16 %v777, %v777
      %v802 = vpack.c.bf16 %v780, %v780
      %v803 = vpack.c.bf16 %v785, %v785
      %v804 = vpack.c.bf16 %v788, %v788
      %v805 = vpack.c.bf16 %v793, %v793
      %v806 = vpack.c.bf16 %v796, %v796
      %807 = vst [vmem:[%s177] sm:$0xf] %v799
      %808 = vst [vmem:[%s177 + $0x4] sm:$0xf] %v800
      %809 = vst [vmem:[%s177 + $0x8] sm:$0xf] %v801
      %810 = vst [vmem:[%s177 + $0xc] sm:$0xf] %v802
      %811 = vst [vmem:[%s177 + $0x10] sm:$0xf] %v803
      %812 = vst [vmem:[%s177 + $0x14] sm:$0xf] %v804
      %813 = vst [vmem:[%s177 + $0x18] sm:$0xf] %v805
      %814 = vst [vmem:[%s177 + $0x1c] sm:$0xf] %v806
      %v815 = vadd.f32 %v769, %v772
      %v816 = vadd.f32 %v815, %v777
      %v817 = vadd.f32 %v816, %v780
      %v818 = vadd.f32 %v817, %v785
      %v819 = vadd.f32 %v818, %v788
      %v820 = vadd.f32 %v819, %v793
      %v821 = vadd.f32 %v820, %v796
      %v822 = vrot.slane %v821, 4
      %v823 = vadd.f32 %v821, %v822
      %v824 = vrot.slane %v823, 2
      %v825 = vadd.f32 %v823, %v824
      %v826 = vrot.slane %v825, 1
      %v827 = vadd.f32 %v825, %v826
      %v828 = vmul.f32 %v769, %v769
      %v829 = vmul.f32 %v772, %v772
      %v830 = vmul.f32 %v777, %v777
      %v831 = vmul.f32 %v780, %v780
      %v832 = vmul.f32 %v785, %v785
      %v833 = vmul.f32 %v788, %v788
      %v834 = vmul.f32 %v793, %v793
      %v835 = vmul.f32 %v796, %v796
      %v836 = vadd.f32 %v828, %v829
      %v837 = vadd.f32 %v836, %v830
      %v838 = vadd.f32 %v837, %v831
      %v839 = vadd.f32 %v838, %v832
      %v840 = vadd.f32 %v839, %v833
      %v841 = vadd.f32 %v840, %v834
      %v842 = vadd.f32 %v841, %v835
      %v843 = vrot.slane %v842, 4
      %v844 = vadd.f32 %v842, %v843
      %v845 = vrot.slane %v844, 2
      %v846 = vadd.f32 %v844, %v845
      %v847 = vrot.slane %v846, 1
      %v848 = vadd.f32 %v846, %v847
      %vm849 = vcmask 1040384
      %v850 = vsel %vm849, %v827, %v848
      %851 = vst [vmem:[%s181] sm:$0x3] %v850
      %p852 = scmp.lt.s32.totalorder %s15, 1
      %s853 = scalar_select %p852, %s15, 1
      %s854 = smul.addr %s853, 8
      %s855 = smul.addr %s854, 4
      %s856 = scalar_lea.vmem %s2, %s855
      %p857 = scmp.lt.s32.totalorder %s15, 1
      %s858 = scalar_select %p857, %s15, 1
      %s859 = smul.addr %s858, 2
      %s860 = scalar_lea.vmem %s3, %s859
      // Predicated region
      $region29: #{down_forward.2} parent=27 // pred_check
        %p861 = pneg %p80
      $region30: #{down_forward.2} parent=27 // pred_check_branch
        %863 = sbr.rel (%p861) target = $region32
      $region31: #{down_forward.2} parent=27 // pred_region
        _
      $region32: #{down_forward.2} parent=27 // pred_fallthru
        _
      // Predicated region
      $region33: #{down_forward.2} parent=27 // pred_check
        %p864 = pneg %p106
      $region34: #{down_forward.2} parent=27 // pred_check_branch
        %866 = sbr.rel (%p864) target = $region36
      $region35: #{down_forward.2} parent=27 // pred_region
        _
      $region36: #{down_forward.2} parent=27 // pred_fallthru
        _
    $region28: #{down_forward.2} parent=5 // pred_fallthru
      _
    %p867 = scmp.le.s32.totalorder 2, %s10
    // Predicated region
    $region37: #{down_forward.2} parent=5 // pred_check
      %p868 = pneg %p867
    $region38: #{down_forward.2} parent=5 // pred_check_branch
      %870 = sbr.rel (%p868) target = $region40
    $region39: #{down_forward.2} parent=5 // pred_region
      %s871 = ssub.s32 %s10, 2
      // Predicated region
      $region41: #{down_forward.2} parent=39 // pred_check
        %p872 = pneg %p86
      $region42: #{down_forward.2} parent=39 // pred_check_branch
        %874 = sbr.rel (%p872) target = $region44
      $region43: #{down_forward.2} parent=39 // pred_region
        %p875 = scmp.lt.s32.totalorder %s16, 1
        %s876 = scalar_select %p875, %s16, 1
        %s877 = smul.addr %s876, 8
        %s878 = smul.addr %s877, 4
        %s879 = scalar_lea.vmem %s2, %s878
      $region44: #{down_forward.2} parent=39 // pred_fallthru
        _
      // Predicated region
      $region45: #{down_forward.2} parent=39 // pred_check
        %p880 = pneg %p112
      $region46: #{down_forward.2} parent=39 // pred_check_branch
        %882 = sbr.rel (%p880) target = $region48
      $region47: #{down_forward.2} parent=39 // pred_region
        %p883 = scmp.lt.s32.totalorder %s16, 1
        %s884 = scalar_select %p883, %s16, 1
        %s885 = smul.addr %s884, 2
        %s886 = scalar_lea.vmem %s3, %s885
      $region48: #{down_forward.2} parent=39 // pred_fallthru
        _
    $region40: #{down_forward.2} parent=5 // pred_fallthru
      _
  $region6: #{down_forward.2} parent=0 // loop_footer
    %s14 = sadd.s32 1, %s10
  $region7: #{down_forward.2} parent=0 // loop_footer_branch
    %9 = sbr.rel target = $region3
  $region8: #{down_forward.2} parent=0 // loop_exit
    _

// kernel: down_forward.3
$region0: #{down_forward.3}
  #allocation0 [shape = 'u32[]', space=smem, size = 0x4, offset = 0x4, fixed_abs, tag = 'smem constant byte address 0x4 - core index']
  #allocation1 [shape = 'u32[144,128]{1,0:T(1,128)}', space=vmem, size = 0x12000, scoped, tag = 'internal scratch']
  #allocation2 [shape = 'f32[10,10,128]{2,1,0:T(8,128)}', space=vmem, size = 0x14000, scoped, tag = 'scratch operand']
  %s0 = inlined_call_operand.vmem [shape: bf16[2,8,8,128], index: 0, kind: input, shape index: {}]
  %s1 = inlined_call_operand.vmem [shape: f32[1,1,1,128], index: 1, kind: input, shape index: {}]
  %s2 = inlined_call_operand.vmem [shape: f32[1,1,1,128], index: 2, kind: input, shape index: {}]
  %s3 = inlined_call_operand.vmem [shape: bf16[9,128,128], index: 3, kind: input, shape index: {}]
  %s4 = inlined_call_operand.vmem [shape: bf16[2,8,8,128], index: 4, kind: output, shape index: {0}]
  %s5 = inlined_call_operand.vmem [shape: f32[2,2,128], index: 5, kind: output, shape index: {1}]
  %6 = xla_tuple %s4, %s5
  %s7 = sld [smem:[#allocation0]]
  $region57: #{down_forward.3} parent=0
    _
  %s9 = ssub.s32 1, %s7
  %s10 = scalar_select 0, %s9, %s7
  loop: start=0, step=1, limit=4
  $region2: #{down_forward.3} parent=0 // loop_pre_header
    _
  $region3: #{down_forward.3} parent=0 // loop_header
    %s12 = sphi 0, %s16
    %p13 = scmp.ge.s32.totalorder %s12, 4
    %s22 = sphi 0, %s24
    %s25 = sphi 0, %s22
    %s26 = sphi 0, %s25
    %s42 = sphi 0, %s26
    %s46 = sphi 0, %s46
    %s48 = sphi 0, %s46
    %s49 = sphi 0, %s48
    %s63 = sphi 0, %s49
    %s67 = sphi 0, %s67
    %s69 = sphi 0, %s67
    %s70 = sphi 0, %s69
    %s84 = sphi 0, %s70
    %s88 = sphi 0, %s88
    %s90 = sphi 0, %s88
    %s91 = sphi 0, %s90
    %s105 = sphi 0, %s91
    %s111 = sphi 0, %s113
    %s114 = sphi 0, %s111
    %s115 = sphi 0, %s114
    %s131 = sphi 0, %s115
    %s137 = sphi 0, %s139
    %s140 = sphi 0, %s137
    %s141 = sphi 0, %s140
    %s157 = sphi 0, %s141
  $region4: #{down_forward.3} parent=0 // loop_header_branch
    %15 = sbr.rel (%p13) target = $region8
  $region5: #{down_forward.3} parent=0 // loop_body
    %s17 = ssub.s32 %s12, 1
    %s18 = ssub.s32 %s12, 2
    %s19 = sadd.s32 %s12, 1
    %s20 = ssub.s32 %s12, %s19
    %p21 = scmp.eq.s32.totalorder %s20, 0
    %s23 = sadd.s32 %s22, 1
    %s24 = scalar_select %p21, %s22, %s23
    %p27 = pneg %p21
    %p28 = scmp.eq.s32.totalorder %s12, 1
    %p29 = por %p27, %p28
    %p30 = scmp.ne.s32.totalorder %s22, %s25
    %p31 = scmp.eq.s32.totalorder %s12, 0
    %p32 = por %p30, %p31
    %p33 = scmp.ne.s32.totalorder %s22, %s25
    %p34 = scmp.eq.s32.totalorder %s17, 1
    %p35 = por %p33, %p34
    %p36 = scmp.ne.s32.totalorder %s25, %s26
    %p37 = scmp.eq.s32.totalorder %s17, 0
    %p38 = por %p36, %p37
    %p39 = scmp.ne.s32.totalorder %s25, %s26
    %p40 = scmp.eq.s32.totalorder %s18, 1
    %p41 = por %p39, %p40
    %p43 = scmp.ne.s32.totalorder %s26, %s42
    %p44 = scmp.eq.s32.totalorder %s18, 0
    %p45 = por %p43, %p44
    %s47 = sadd.s32 %s46, 1
    %p50 = scmp.eq.s32.totalorder %s12, 1
    %p51 = scmp.ne.s32.totalorder %s46, %s48
    %p52 = scmp.eq.s32.totalorder %s12, 0
    %p53 = por %p51, %p52
    %p54 = scmp.ne.s32.totalorder %s46, %s48
    %p55 = scmp.eq.s32.totalorder %s17, 1
    %p56 = por %p54, %p55
    %p57 = scmp.ne.s32.totalorder %s48, %s49
    %p58 = scmp.eq.s32.totalorder %s17, 0
    %p59 = por %p57, %p58
    %p60 = scmp.ne.s32.totalorder %s48, %s49
    %p61 = scmp.eq.s32.totalorder %s18, 1
    %p62 = por %p60, %p61
    %p64 = scmp.ne.s32.totalorder %s49, %s63
    %p65 = scmp.eq.s32.totalorder %s18, 0
    %p66 = por %p64, %p65
    %s68 = sadd.s32 %s67, 1
    %p71 = scmp.eq.s32.totalorder %s12, 1
    %p72 = scmp.ne.s32.totalorder %s67, %s69
    %p73 = scmp.eq.s32.totalorder %s12, 0
    %p74 = por %p72, %p73
    %p75 = scmp.ne.s32.totalorder %s67, %s69
    %p76 = scmp.eq.s32.totalorder %s17, 1
    %p77 = por %p75, %p76
    %p78 = scmp.ne.s32.totalorder %s69, %s70
    %p79 = scmp.eq.s32.totalorder %s17, 0
    %p80 = por %p78, %p79
    %p81 = scmp.ne.s32.totalorder %s69, %s70
    %p82 = scmp.eq.s32.totalorder %s18, 1
    %p83 = por %p81, %p82
    %p85 = scmp.ne.s32.totalorder %s70, %s84
    %p86 = scmp.eq.s32.totalorder %s18, 0
    %p87 = por %p85, %p86
    %s89 = sadd.s32 %s88, 1
    %p92 = scmp.eq.s32.totalorder %s12, 1
    %p93 = scmp.ne.s32.totalorder %s88, %s90
    %p94 = scmp.eq.s32.totalorder %s12, 0
    %p95 = por %p93, %p94
    %p96 = scmp.ne.s32.totalorder %s88, %s90
    %p97 = scmp.eq.s32.totalorder %s17, 1
    %p98 = por %p96, %p97
    %p99 = scmp.ne.s32.totalorder %s90, %s91
    %p100 = scmp.eq.s32.totalorder %s17, 0
    %p101 = por %p99, %p100
    %p102 = scmp.ne.s32.totalorder %s90, %s91
    %p103 = scmp.eq.s32.totalorder %s18, 1
    %p104 = por %p102, %p103
    %p106 = scmp.ne.s32.totalorder %s91, %s105
    %p107 = scmp.eq.s32.totalorder %s18, 0
    %p108 = por %p106, %p107
    %s109 = ssub.s32 %s12, %s19
    %p110 = scmp.eq.s32.totalorder %s109, 0
    %s112 = sadd.s32 %s111, 1
    %s113 = scalar_select %p110, %s111, %s112
    %p116 = pneg %p110
    %p117 = scmp.eq.s32.totalorder %s12, 1
    %p118 = por %p116, %p117
    %p119 = scmp.ne.s32.totalorder %s111, %s114
    %p120 = scmp.eq.s32.totalorder %s12, 0
    %p121 = por %p119, %p120
    %p122 = scmp.ne.s32.totalorder %s111, %s114
    %p123 = scmp.eq.s32.totalorder %s17, 1
    %p124 = por %p122, %p123
    %p125 = scmp.ne.s32.totalorder %s114, %s115
    %p126 = scmp.eq.s32.totalorder %s17, 0
    %p127 = por %p125, %p126
    %p128 = scmp.ne.s32.totalorder %s114, %s115
    %p129 = scmp.eq.s32.totalorder %s18, 1
    %p130 = por %p128, %p129
    %p132 = scmp.ne.s32.totalorder %s115, %s131
    %p133 = scmp.eq.s32.totalorder %s18, 0
    %p134 = por %p132, %p133
    %s135 = ssub.s32 %s12, %s19
    %p136 = scmp.eq.s32.totalorder %s135, 0
    %s138 = sadd.s32 %s137, 1
    %s139 = scalar_select %p136, %s137, %s138
    %p142 = pneg %p136
    %p143 = scmp.eq.s32.totalorder %s12, 1
    %p144 = por %p142, %p143
    %p145 = scmp.ne.s32.totalorder %s137, %s140
    %p146 = scmp.eq.s32.totalorder %s12, 0
    %p147 = por %p145, %p146
    %p148 = scmp.ne.s32.totalorder %s137, %s140
    %p149 = scmp.eq.s32.totalorder %s17, 1
    %p150 = por %p148, %p149
    %p151 = scmp.ne.s32.totalorder %s140, %s141
    %p152 = scmp.eq.s32.totalorder %s17, 0
    %p153 = por %p151, %p152
    %p154 = scmp.ne.s32.totalorder %s140, %s141
    %p155 = scmp.eq.s32.totalorder %s18, 1
    %p156 = por %p154, %p155
    %p158 = scmp.ne.s32.totalorder %s141, %s157
    %p159 = scmp.eq.s32.totalorder %s18, 0
    %p160 = por %p158, %p159
    %p161 = scmp.le.s32.totalorder 1, %s12
    %p162 = scmp.lt.s32.totalorder %s12, 3
    %p163 = pnand %p161, %p162
    %p164 = pneg %p163
    // Predicated region
    $region9: #{down_forward.3} parent=5 // pred_check
      _
    $region10: #{down_forward.3} parent=5 // pred_check_branch
      %166 = sbr.rel (%p163) target = $region12
    $region11: #{down_forward.3} parent=5 // pred_region
      %s167 = ssub.s32 %s12, 1
      // Predicated region
      $region13: #{down_forward.3} parent=11 // pred_check
        %p168 = pneg %p59
      $region14: #{down_forward.3} parent=11 // pred_check_branch
        %170 = sbr.rel (%p168) target = $region16
      $region15: #{down_forward.3} parent=11 // pred_region
        _
      $region16: #{down_forward.3} parent=11 // pred_fallthru
        _
      // Predicated region
      $region17: #{down_forward.3} parent=11 // pred_check
        %p171 = pneg %p80
      $region18: #{down_forward.3} parent=11 // pred_check_branch
        %173 = sbr.rel (%p171) target = $region20
      $region19: #{down_forward.3} parent=11 // pred_region
        _
      $region20: #{down_forward.3} parent=11 // pred_fallthru
        _
      // Predicated region
      $region21: #{down_forward.3} parent=11 // pred_check
        %p174 = pneg %p101
      $region22: #{down_forward.3} parent=11 // pred_check_branch
        %176 = sbr.rel (%p174) target = $region24
      $region23: #{down_forward.3} parent=11 // pred_region
        _
      $region24: #{down_forward.3} parent=11 // pred_fallthru
        _
    $region12: #{down_forward.3} parent=5 // pred_fallthru
      _
    %p177 = scmp.lt.s32.totalorder %s12, 2
    // Predicated region
    $region25: #{down_forward.3} parent=5 // pred_check
      %p178 = pneg %p177
    $region26: #{down_forward.3} parent=5 // pred_check_branch
      %180 = sbr.rel (%p178) target = $region28
    $region27: #{down_forward.3} parent=5 // pred_region
      // Predicated region
      $region29: #{down_forward.3} parent=27 // pred_check
        %p181 = pneg %p32
      $region30: #{down_forward.3} parent=27 // pred_check_branch
        %183 = sbr.rel (%p181) target = $region32
      $region31: #{down_forward.3} parent=27 // pred_region
        %p184 = scmp.lt.s32.totalorder %s12, 1
        %s185 = scalar_select %p184, %s12, 1
        %s186 = smul.addr %s185, 8
        %s187 = smul.addr %s186, 4
        %s188 = scalar_lea.vmem %s0, %s187
      $region32: #{down_forward.3} parent=27 // pred_fallthru
        _
    $region28: #{down_forward.3} parent=5 // pred_fallthru
      _
    %p189 = scmp.le.s32.totalorder 1, %s12
    %p190 = scmp.lt.s32.totalorder %s12, 3
    %p191 = pnand %p189, %p190
    %p192 = pneg %p191
    // Predicated region
    $region33: #{down_forward.3} parent=5 // pred_check
      _
    $region34: #{down_forward.3} parent=5 // pred_check_branch
      %194 = sbr.rel (%p191) target = $region36
    $region35: #{down_forward.3} parent=5 // pred_region
      %s195 = ssub.s32 %s12, 1
      %p196 = scmp.lt.s32.totalorder %s17, 1
      %s197 = scalar_select %p196, %s17, 1
      %s198 = smul.addr %s197, 8
      %s199 = smul.addr %s198, 4
      %s200 = scalar_lea.vmem %s0, %s199
      %p201 = pneg %p38
      %p202 = pneg %p35
      %p203 = pneg %p59
      %p204 = pneg %p56
      %p205 = pneg %p80
      %p206 = pneg %p77
      %p207 = pneg %p101
      %p208 = pneg %p98
      %p209 = pneg %p127
      %p210 = pneg %p124
      %p211 = scmp.lt.s32.totalorder %s17, 1
      %s212 = scalar_select %p211, %s17, 1
      %s213 = smul.addr %s212, 8
      %s214 = smul.addr %s213, 4
      %s215 = scalar_lea.vmem %s4, %s214
      %p216 = pneg %p153
      %p217 = pneg %p150
      %p218 = scmp.lt.s32.totalorder %s17, 1
      %s219 = scalar_select %p218, %s17, 1
      %s220 = smul.addr %s219, 2
      %s221 = scalar_lea.vmem %s5, %s220
      %p222 = scmp.lt.s32.totalorder %s17, 1
      %s223 = scalar_select %p222, %s17, 1
      %s224 = smul.addr %s223, 8
      %s225 = smul.addr %s224, 4
      %s226 = scalar_lea.vmem %s0, %s225
      %p227 = scmp.lt.s32.totalorder %s17, 1
      %s228 = scalar_select %p227, %s17, 1
      %s229 = smul.addr %s228, 8
      %s230 = smul.addr %s229, 4
      %s231 = scalar_lea.vmem %s4, %s230
      %p232 = scmp.lt.s32.totalorder %s17, 1
      %s233 = scalar_select %p232, %s17, 1
      %s234 = smul.addr %s233, 2
      %s235 = scalar_lea.vmem %s5, %s234
      %v237 = vld [vmem:[%s226] sm:$0xf]
      %v238 = vld [vmem:[%s226 + $0x4] sm:$0xf]
      %v239 = vld [vmem:[%s226 + $0x8] sm:$0xf]
      %v240 = vld [vmem:[%s226 + $0xc] sm:$0xf]
      %v241 = vld [vmem:[%s226 + $0x10] sm:$0xf]
      %v242 = vld [vmem:[%s226 + $0x14] sm:$0xf]
      %v243 = vld [vmem:[%s226 + $0x18] sm:$0xf]
      %v244 = vld [vmem:[%s226 + $0x1c] sm:$0xf]
      %v245 = vunpack.c.l.bf16 %v237
      %v246 = vunpack.c.l.bf16 %v238
      %v247 = vunpack.c.l.bf16 %v239
      %v248 = vunpack.c.l.bf16 %v240
      %v249 = vunpack.c.l.bf16 %v241
      %v250 = vunpack.c.l.bf16 %v242
      %v251 = vunpack.c.l.bf16 %v243
      %v252 = vunpack.c.l.bf16 %v244
      %v253 = vld [vmem:[%s1] sm:$0x1]
      %v255 = vlaneseq
      %v256 = vshrl.u32 %v255, 7
      %v257 = vsub.s32 0, %v256
      %v258 = vrot.slane %v253, %v257
      %v260 = vmul.f32 %v245, %v258
      %v261 = vmul.f32 %v246, %v258
      %v262 = vmul.f32 %v247, %v258
      %v263 = vmul.f32 %v248, %v258
      %v264 = vmul.f32 %v249, %v258
      %v265 = vmul.f32 %v250, %v258
      %v266 = vmul.f32 %v251, %v258
      %v267 = vmul.f32 %v252, %v258
      %v268 = vld [vmem:[%s2] sm:$0x1]
      %v270 = vlaneseq
      %v271 = vshrl.u32 %v270, 7
      %v272 = vsub.s32 0, %v271
      %v273 = vrot.slane %v268, %v272
      %v275 = vadd.f32 %v260, %v273
      %v276 = vadd.f32 %v261, %v273
      %v277 = vadd.f32 %v262, %v273
      %v278 = vadd.f32 %v263, %v273
      %v279 = vadd.f32 %v264, %v273
      %v280 = vadd.f32 %v265, %v273
      %v281 = vadd.f32 %v266, %v273
      %v282 = vadd.f32 %v267, %v273
      %vm283 = vcmp.ge.f32.partialorder %v275, 0.0
      %vm284 = vcmp.ge.f32.partialorder %v276, 0.0
      %vm285 = vcmp.ge.f32.partialorder %v277, 0.0
      %vm286 = vcmp.ge.f32.partialorder %v278, 0.0
      %vm287 = vcmp.ge.f32.partialorder %v279, 0.0
      %vm288 = vcmp.ge.f32.partialorder %v280, 0.0
      %vm289 = vcmp.ge.f32.partialorder %v281, 0.0
      %vm290 = vcmp.ge.f32.partialorder %v282, 0.0
      %v291 = vmul.f32 %v275, 0.01
      %v292 = vmul.f32 %v276, 0.01
      %v293 = vmul.f32 %v277, 0.01
      %v294 = vmul.f32 %v278, 0.01
      %v295 = vmul.f32 %v279, 0.01
      %v296 = vmul.f32 %v280, 0.01
      %v297 = vmul.f32 %v281, 0.01
      %v298 = vmul.f32 %v282, 0.01
      %v299 = vsel %vm283, %v275, %v291
      %v300 = vsel %vm284, %v276, %v292
      %v301 = vsel %vm285, %v277, %v293
      %v302 = vsel %vm286, %v278, %v294
      %v303 = vsel %vm287, %v279, %v295
      %v304 = vsel %vm288, %v280, %v296
      %v305 = vsel %vm289, %v281, %v297
      %v306 = vsel %vm290, %v282, %v298
      %307 = vst [vmem:[#allocation2] sm:$0xff] 0.0
      %308 = vst [vmem:[#allocation2 + $0x8] sm:$0x3] 0.0
      %s309 = scalar_lea.vmem [#allocation2], 144
      %310 = vst [vmem:[%s309] sm:$0xff] 0.0
      %311 = vst [vmem:[%s309 + $0x8] sm:$0x3] 0.0
      %312 = vst [vmem:[#allocation2] sm:$0x1] 0.0
      %313 = vst [vmem:[#allocation2 + $0x10] sm:$0x1] 0.0
      %314 = vst [vmem:[#allocation2 + $0x20] sm:$0x1] 0.0
      %315 = vst [vmem:[#allocation2 + $0x30] sm:$0x1] 0.0
      %316 = vst [vmem:[#allocation2 + $0x40] sm:$0x1] 0.0
      %317 = vst [vmem:[#allocation2 + $0x50] sm:$0x1] 0.0
      %318 = vst [vmem:[#allocation2 + $0x60] sm:$0x1] 0.0
      %319 = vst [vmem:[#allocation2 + $0x70] sm:$0x1] 0.0
      %320 = vst [vmem:[#allocation2 + $0x80] sm:$0x1] 0.0
      %321 = vst [vmem:[#allocation2 + $0x90] sm:$0x1] 0.0
      %322 = vst [vmem:[#allocation2 + $0x9] sm:$0x1] 0.0
      %323 = vst [vmem:[#allocation2 + $0x19] sm:$0x1] 0.0
      %324 = vst [vmem:[#allocation2 + $0x29] sm:$0x1] 0.0
      %325 = vst [vmem:[#allocation2 + $0x39] sm:$0x1] 0.0
      %326 = vst [vmem:[#allocation2 + $0x49] sm:$0x1] 0.0
      %327 = vst [vmem:[#allocation2 + $0x59] sm:$0x1] 0.0
      %328 = vst [vmem:[#allocation2 + $0x69] sm:$0x1] 0.0
      %329 = vst [vmem:[#allocation2 + $0x79] sm:$0x1] 0.0
      %330 = vst [vmem:[#allocation2 + $0x89] sm:$0x1] 0.0
      %331 = vst [vmem:[#allocation2 + $0x99] sm:$0x1] 0.0
      %s332 = scalar_lea.vmem [#allocation2], 16
      %333 = vst [vmem:[%s332 + $0x1] sm:$0xff] %v299
      %334 = vst [vmem:[%s332 + $0x11] sm:$0xff] %v300
      %335 = vst [vmem:[%s332 + $0x21] sm:$0xff] %v301
      %336 = vst [vmem:[%s332 + $0x31] sm:$0xff] %v302
      %337 = vst [vmem:[%s332 + $0x41] sm:$0xff] %v303
      %338 = vst [vmem:[%s332 + $0x51] sm:$0xff] %v304
      %339 = vst [vmem:[%s332 + $0x61] sm:$0xff] %v305
      %340 = vst [vmem:[%s332 + $0x71] sm:$0xff] %v306
      %v341 = vld [vmem:[#allocation2] sm:$0xff]
      %v342 = vld [vmem:[#allocation2 + $0x10] sm:$0xff]
      %v343 = vld [vmem:[#allocation2 + $0x20] sm:$0xff]
      %v344 = vld [vmem:[#allocation2 + $0x30] sm:$0xff]
      %v345 = vld [vmem:[#allocation2 + $0x40] sm:$0xff]
      %v346 = vld [vmem:[#allocation2 + $0x50] sm:$0xff]
      %v347 = vld [vmem:[#allocation2 + $0x60] sm:$0xff]
      %v348 = vld [vmem:[#allocation2 + $0x70] sm:$0xff]
      %v349 = vpack.c.bf16 %v342, %v341
      %v350 = vpack.c.bf16 %v344, %v343
      %v351 = vpack.c.bf16 %v346, %v345
      %v352 = vpack.c.bf16 %v348, %v347
      %v353 = vld [vmem:[%s3] sm:$0xf]
      %v354 = vld [vmem:[%s3 + $0x4] sm:$0xf]
      %v355 = vld [vmem:[%s3 + $0x8] sm:$0xf]
      %v356 = vld [vmem:[%s3 + $0xc] sm:$0xf]
      %v357 = vld [vmem:[%s3 + $0x10] sm:$0xf]
      %v358 = vld [vmem:[%s3 + $0x14] sm:$0xf]
      %v359 = vld [vmem:[%s3 + $0x18] sm:$0xf]
      %v360 = vld [vmem:[%s3 + $0x1c] sm:$0xf]
      %v361 = vld [vmem:[%s3 + $0x20] sm:$0xf]
      %v362 = vld [vmem:[%s3 + $0x24] sm:$0xf]
      %v363 = vld [vmem:[%s3 + $0x28] sm:$0xf]
      %v364 = vld [vmem:[%s3 + $0x2c] sm:$0xf]
      %v365 = vld [vmem:[%s3 + $0x30] sm:$0xf]
      %v366 = vld [vmem:[%s3 + $0x34] sm:$0xf]
      %v367 = vld [vmem:[%s3 + $0x38] sm:$0xf]
      %v368 = vld [vmem:[%s3 + $0x3c] sm:$0xf]
      %v369 = vld [vmem:[#allocation2 + $0x1] sm:$0xff]
      %v370 = vld [vmem:[#allocation2 + $0x11] sm:$0xff]
      %v371 = vld [vmem:[#allocation2 + $0x21] sm:$0xff]
      %v372 = vld [vmem:[#allocation2 + $0x31] sm:$0xff]
      %v373 = vld [vmem:[#allocation2 + $0x41] sm:$0xff]
      %v374 = vld [vmem:[#allocation2 + $0x51] sm:$0xff]
      %v375 = vld [vmem:[#allocation2 + $0x61] sm:$0xff]
      %v376 = vld [vmem:[#allocation2 + $0x71] sm:$0xff]
      %v377 = vpack.c.bf16 %v370, %v369
      %v378 = vpack.c.bf16 %v372, %v371
      %v379 = vpack.c.bf16 %v374, %v373
      %v380 = vpack.c.bf16 %v376, %v375
      %s381 = scalar_lea.vmem %s3, 64
      %v382 = vld [vmem:[%s381] sm:$0xf]
      %v383 = vld [vmem:[%s381 + $0x4] sm:$0xf]
      %v384 = vld [vmem:[%s381 + $0x8] sm:$0xf]
      %v385 = vld [vmem:[%s381 + $0xc] sm:$0xf]
      %v386 = vld [vmem:[%s381 + $0x10] sm:$0xf]
      %v387 = vld [vmem:[%s381 + $0x14] sm:$0xf]
      %v388 = vld [vmem:[%s381 + $0x18] sm:$0xf]
      %v389 = vld [vmem:[%s381 + $0x1c] sm:$0xf]
      %v390 = vld [vmem:[%s381 + $0x20] sm:$0xf]
      %v391 = vld [vmem:[%s381 + $0x24] sm:$0xf]
      %v392 = vld [vmem:[%s381 + $0x28] sm:$0xf]
      %v393 = vld [vmem:[%s381 + $0x2c] sm:$0xf]
      %v394 = vld [vmem:[%s381 + $0x30] sm:$0xf]
      %v395 = vld [vmem:[%s381 + $0x34] sm:$0xf]
      %v396 = vld [vmem:[%s381 + $0x38] sm:$0xf]
      %v397 = vld [vmem:[%s381 + $0x3c] sm:$0xf]
      %v414 = vunpack.c.l.b16 %v382
      %v415 = vunpack.c.l.b16 %v383
      %v416 = vunpack.c.l.b16 %v384
      %v417 = vunpack.c.l.b16 %v385
      %v418 = vunpack.c.l.b16 %v386
      %v419 = vunpack.c.l.b16 %v387
      %v420 = vunpack.c.l.b16 %v388
      %v421 = vunpack.c.l.b16 %v389
      %v422 = vunpack.c.l.b16 %v390
      %v423 = vunpack.c.l.b16 %v391
      %v424 = vunpack.c.l.b16 %v392
      %v425 = vunpack.c.l.b16 %v393
      %v426 = vunpack.c.l.b16 %v394
      %v427 = vunpack.c.l.b16 %v395
      %v428 = vunpack.c.l.b16 %v396
      %v429 = vunpack.c.l.b16 %v397
      %v430 = vpack.c.b16 %v415, %v414
      %v431 = vpack.c.b16 %v417, %v416
      %v432 = vpack.c.b16 %v419, %v418
      %v433 = vpack.c.b16 %v421, %v420
      %v434 = vpack.c.b16 %v423, %v422
      %v435 = vpack.c.b16 %v425, %v424
      %v436 = vpack.c.b16 %v427, %v426
      %v437 = vpack.c.b16 %v429, %v428
      %446 = vmatprep.subr.bf16.mxu0 0
      %447 = vmatpush1.bf16.msra.mxu0 %v437
      %448 = vmatprep.subr.bf16.mxu0 0
      %449 = vmatpush1.bf16.msra.mxu0 %v436
      %450 = vmatprep.subr.bf16.mxu0 0
      %451 = vmatpush1.bf16.msra.mxu0 %v435
      %452 = vmatprep.subr.bf16.mxu0 0
      %453 = vmatpush1.bf16.msra.mxu0 %v434
      %454 = vmatprep.subr.bf16.mxu0 0
      %455 = vmatpush1.bf16.msra.mxu0 %v433
      %456 = vmatprep.subr.bf16.mxu0 0
      %457 = vmatpush1.bf16.msra.mxu0 %v432
      %458 = vmatprep.subr.bf16.mxu0 0
      %459 = vmatpush1.bf16.msra.mxu0 %v431
      %460 = vmatprep.subr.bf16.mxu0 0
      %461 = vmatpush1.bf16.msra.mxu0 %v430
      %462 = vmatprep.subr.bf16.mxu0 0
      %463 = vmatpush2.bf16.msra.mxu0 0
      %464 = vmatprep.subr.bf16.mxu0 0
      %465 = vmatpush2.bf16.msra.mxu0 0
      %466 = vmatprep.subr.bf16.mxu0 0
      %467 = vmatpush2.bf16.msra.mxu0 0
      %468 = vmatprep.subr.bf16.mxu0 0
      %469 = vmatpush2.bf16.msra.mxu0 0
      %470 = vmatprep.subr.bf16.mxu0 0
      %471 = vmatpush2.bf16.msra.mxu0 0
      %472 = vmatprep.subr.bf16.mxu0 0
      %473 = vmatpush2.bf16.msra.mxu0 0
      %474 = vmatprep.subr.bf16.mxu0 0
      %475 = vmatpush2.bf16.msra.mxu0 0
      %476 = vmatprep.subr.bf16.mxu0 0
      %477 = vmatpush2.bf16.msra.mxu0 0
      %478 = vmatprep.mubr.bf16.mxu0 0
      %479 = vmatmul.mubr.bf16.gmra.mxu0 %v377
      %v480 = vpop.f32.mrf.mxu0
      %v481 = vadd.f32 0.0, %v480
      %v482 = vpop.f32.mrf.mxu0
      %v483 = vpop.f32.mrf.mxu0
      %v484 = vadd.f32 0.0, %v483
      %v485 = vpop.f32.mrf.mxu0
      %486 = vmatprep.mubr.bf16.mxu0 0
      %487 = vmatmul.mubr.bf16.gmra.mxu0 %v378
      %v488 = vpop.f32.mrf.mxu0
      %v489 = vadd.f32 0.0, %v488
      %v490 = vpop.f32.mrf.mxu0
      %v491 = vpop.f32.mrf.mxu0
      %v492 = vadd.f32 0.0, %v491
      %v493 = vpop.f32.mrf.mxu0
      %494 = vmatprep.mubr.bf16.mxu0 0
      %495 = vmatmul.mubr.bf16.gmra.mxu0 %v379
      %v496 = vpop.f32.mrf.mxu0
      %v497 = vadd.f32 0.0, %v496
      %v498 = vpop.f32.mrf.mxu0
      %v499 = vpop.f32.mrf.mxu0
      %v500 = vadd.f32 0.0, %v499
      %v501 = vpop.f32.mrf.mxu0
      %502 = vmatprep.mubr.bf16.mxu0 0
      %503 = vmatmul.mubr.bf16.gmra.mxu0 %v380
      %v504 = vpop.f32.mrf.mxu0
      %v505 = vadd.f32 0.0, %v504
      %v506 = vpop.f32.mrf.mxu0
      %v507 = vpop.f32.mrf.mxu0
      %v508 = vadd.f32 0.0, %v507
      %v509 = vpop.f32.mrf.mxu0
      %510 = vdwg.mxu0
      %v527 = vunpack.c.l.b16 %v353
      %v528 = vunpack.c.l.b16 %v354
      %v529 = vunpack.c.l.b16 %v355
      %v530 = vunpack.c.l.b16 %v356
      %v531 = vunpack.c.l.b16 %v357
      %v532 = vunpack.c.l.b16 %v358
      %v533 = vunpack.c.l.b16 %v359
      %v534 = vunpack.c.l.b16 %v360
      %v535 = vunpack.c.l.b16 %v361
      %v536 = vunpack.c.l.b16 %v362
      %v537 = vunpack.c.l.b16 %v363
      %v538 = vunpack.c.l.b16 %v364
      %v539 = vunpack.c.l.b16 %v365
      %v540 = vunpack.c.l.b16 %v366
      %v541 = vunpack.c.l.b16 %v367
      %v542 = vunpack.c.l.b16 %v368
      %v543 = vpack.c.b16 %v528, %v527
      %v544 = vpack.c.b16 %v530, %v529
      %v545 = vpack.c.b16 %v532, %v531
      %v546 = vpack.c.b16 %v534, %v533
      %v547 = vpack.c.b16 %v536, %v535
      %v548 = vpack.c.b16 %v538, %v537
      %v549 = vpack.c.b16 %v540, %v539
      %v550 = vpack.c.b16 %v542, %v541
      %559 = vmatprep.subr.bf16.mxu0 0
      %560 = vmatpush1.bf16.msra.mxu0 %v550
      %561 = vmatprep.subr.bf16.mxu0 0
      %562 = vmatpush1.bf16.msra.mxu0 %v549
      %563 = vmatprep.subr.bf16.mxu0 0
      %564 = vmatpush1.bf16.msra.mxu0 %v548
      %565 = vmatprep.subr.bf16.mxu0 0
      %566 = vmatpush1.bf16.msra.mxu0 %v547
      %567 = vmatprep.subr.bf16.mxu0 0
      %568 = vmatpush1.bf16.msra.mxu0 %v546
      %569 = vmatprep.subr.bf16.mxu0 0
      %570 = vmatpush1.bf16.msra.mxu0 %v545
      %571 = vmatprep.subr.bf16.mxu0 0
      %572 = vmatpush1.bf16.msra.mxu0 %v544
      %573 = vmatprep.subr.bf16.mxu0 0
      %574 = vmatpush1.bf16.msra.mxu0 %v543
      %575 = vmatprep.subr.bf16.mxu0 0
      %576 = vmatpush2.bf16.msra.mxu0 0
      %577 = vmatprep.subr.bf16.mxu0 0
      %578 = vmatpush2.bf16.msra.mxu0 0
      %579 = vmatprep.subr.bf16.mxu0 0
      %580 = vmatpush2.bf16.msra.mxu0 0
      %581 = vmatprep.subr.bf16.mxu0 0
      %582 = vmatpush2.bf16.msra.mxu0 0
      %583 = vmatprep.subr.bf16.mxu0 0
      %584 = vmatpush2.bf16.msra.mxu0 0
      %585 = vmatprep.subr.bf16.mxu0 0
      %586 = vmatpush2.bf16.msra.mxu0 0
      %587 = vmatprep.subr.bf16.mxu0 0
      %588 = vmatpush2.bf16.msra.mxu0 0
      %589 = vmatprep.subr.bf16.mxu0 0
      %590 = vmatpush2.bf16.msra.mxu0 0
      %591 = vmatprep.mubr.bf16.mxu0 0
      %592 = vmatmul.mubr.bf16.gmra.mxu0 %v349
      %v593 = vpop.f32.mrf.mxu0
      %v594 = vadd.f32 %v481, %v593
      %v595 = vpop.f32.mrf.mxu0
      %v596 = vpop.f32.mrf.mxu0
      %v597 = vadd.f32 %v484, %v596
      %v598 = vpop.f32.mrf.mxu0
      %599 = vmatprep.mubr.bf16.mxu0 0
      %600 = vmatmul.mubr.bf16.gmra.mxu0 %v350
      %v601 = vpop.f32.mrf.mxu0
      %v602 = vadd.f32 %v489, %v601
      %v603 = vpop.f32.mrf.mxu0
      %v604 = vpop.f32.mrf.mxu0
      %v605 = vadd.f32 %v492, %v604
      %v606 = vpop.f32.mrf.mxu0
      %607 = vmatprep.mubr.bf16.mxu0 0
      %608 = vmatmul.mubr.bf16.gmra.mxu0 %v351
      %v609 = vpop.f32.mrf.mxu0
      %v610 = vadd.f32 %v497, %v609
      %v611 = vpop.f32.mrf.mxu0
      %v612 = vpop.f32.mrf.mxu0
      %v613 = vadd.f32 %v500, %v612
      %v614 = vpop.f32.mrf.mxu0
      %615 = vmatprep.mubr.bf16.mxu0 0
      %616 = vmatmul.mubr.bf16.gmra.mxu0 %v352
      %v617 = vpop.f32.mrf.mxu0
      %v618 = vadd.f32 %v505, %v617
      %v619 = vpop.f32.mrf.mxu0
      %v620 = vpop.f32.mrf.mxu0
      %v621 = vadd.f32 %v508, %v620
      %v622 = vpop.f32.mrf.mxu0
      %623 = vdwg.mxu0
      %v624 = vld [vmem:[#allocation2 + $0x2] sm:$0xff]
      %v625 = vld [vmem:[#allocation2 + $0x12] sm:$0xff]
      %v626 = vld [vmem:[#allocation2 + $0x22] sm:$0xff]
      %v627 = vld [vmem:[#allocation2 + $0x32] sm:$0xff]
      %v628 = vld [vmem:[#allocation2 + $0x42] sm:$0xff]
      %v629 = vld [vmem:[#allocation2 + $0x52] sm:$0xff]
      %v630 = vld [vmem:[#allocation2 + $0x62] sm:$0xff]
      %v631 = vld [vmem:[#allocation2 + $0x72] sm:$0xff]
      %v632 = vpack.c.bf16 %v625, %v624
      %v633 = vpack.c.bf16 %v627, %v626
      %v634 = vpack.c.bf16 %v629, %v628
      %v635 = vpack.c.bf16 %v631, %v630
      %s636 = scalar_lea.vmem %s3, 128
      %v637 = vld [vmem:[%s636] sm:$0xf]
      %v638 = vld [vmem:[%s636 + $0x4] sm:$0xf]
      %v639 = vld [vmem:[%s636 + $0x8] sm:$0xf]
      %v640 = vld [vmem:[%s636 + $0xc] sm:$0xf]
      %v641 = vld [vmem:[%s636 + $0x10] sm:$0xf]
      %v642 = vld [vmem:[%s636 + $0x14] sm:$0xf]
      %v643 = vld [vmem:[%s636 + $0x18] sm:$0xf]
      %v644 = vld [vmem:[%s636 + $0x1c] sm:$0xf]
      %v645 = vld [vmem:[%s636 + $0x20] sm:$0xf]
      %v646 = vld [vmem:[%s636 + $0x24] sm:$0xf]
      %v647 = vld [vmem:[%s636 + $0x28] sm:$0xf]
      %v648 = vld [vmem:[%s636 + $0x2c] sm:$0xf]
      %v649 = vld [vmem:[%s636 + $0x30] sm:$0xf]
      %v650 = vld [vmem:[%s636 + $0x34] sm:$0xf]
      %v651 = vld [vmem:[%s636 + $0x38] sm:$0xf]
      %v652 = vld [vmem:[%s636 + $0x3c] sm:$0xf]
      %v669 = vunpack.c.l.b16 %v637
      %v670 = vunpack.c.l.b16 %v638
      %v671 = vunpack.c.l.b16 %v639
      %v672 = vunpack.c.l.b16 %v640
      %v673 = vunpack.c.l.b16 %v641
      %v674 = vunpack.c.l.b16 %v642
      %v675 = vunpack.c.l.b16 %v643
      %v676 = vunpack.c.l.b16 %v644
      %v677 = vunpack.c.l.b16 %v645
      %v678 = vunpack.c.l.b16 %v646
      %v679 = vunpack.c.l.b16 %v647
      %v680 = vunpack.c.l.b16 %v648
      %v681 = vunpack.c.l.b16 %v649
      %v682 = vunpack.c.l.b16 %v650
      %v683 = vunpack.c.l.b16 %v651
      %v684 = vunpack.c.l.b16 %v652
      %v685 = vpack.c.b16 %v670, %v669
      %v686 = vpack.c.b16 %v672, %v671
      %v687 = vpack.c.b16 %v674, %v673
      %v688 = vpack.c.b16 %v676, %v675
      %v689 = vpack.c.b16 %v678, %v677
      %v690 = vpack.c.b16 %v680, %v679
      %v691 = vpack.c.b16 %v682, %v681
      %v692 = vpack.c.b16 %v684, %v683
      %701 = vmatprep.subr.bf16.mxu0 0
      %702 = vmatpush1.bf16.msra.mxu0 %v692
      %703 = vmatprep.subr.bf16.mxu0 0
      %704 = vmatpush1.bf16.msra.mxu0 %v691
      %705 = vmatprep.subr.bf16.mxu0 0
      %706 = vmatpush1.bf16.msra.mxu0 %v690
      %707 = vmatprep.subr.bf16.mxu0 0
      %708 = vmatpush1.bf16.msra.mxu0 %v689
      %709 = vmatprep.subr.bf16.mxu0 0
      %710 = vmatpush1.bf16.msra.mxu0 %v688
      %711 = vmatprep.subr.bf16.mxu0 0
      %712 = vmatpush1.bf16.msra.mxu0 %v687
      %713 = vmatprep.subr.bf16.mxu0 0
      %714 = vmatpush1.bf16.msra.mxu0 %v686
      %715 = vmatprep.subr.bf16.mxu0 0
      %716 = vmatpush1.bf16.msra.mxu0 %v685
      %717 = vmatprep.subr.bf16.mxu0 0
      %718 = vmatpush2.bf16.msra.mxu0 0
      %719 = vmatprep.subr.bf16.mxu0 0
      %720 = vmatpush2.bf16.msra.mxu0 0
      %721 = vmatprep.subr.bf16.mxu0 0
      %722 = vmatpush2.bf16.msra.mxu0 0
      %723 = vmatprep.subr.bf16.mxu0 0
      %724 = vmatpush2.bf16.msra.mxu0 0
      %725 = vmatprep.subr.bf16.mxu0 0
      %726 = vmatpush2.bf16.msra.mxu0 0
      %727 = vmatprep.subr.bf16.mxu0 0
      %728 = vmatpush2.bf16.msra.mxu0 0
      %729 = vmatprep.subr.bf16.mxu0 0
      %730 = vmatpush2.bf16.msra.mxu0 0
      %731 = vmatprep.subr.bf16.mxu0 0
      %732 = vmatpush2.bf16.msra.mxu0 0
      %733 = vmatprep.mubr.bf16.mxu0 0
      %734 = vmatmul.mubr.bf16.gmra.mxu0 %v632
      %v735 = vpop.f32.mrf.mxu0
      %v736 = vadd.f32 0.0, %v735
      %v737 = vpop.f32.mrf.mxu0
      %v738 = vpop.f32.mrf.mxu0
      %v739 = vadd.f32 0.0, %v738
      %v740 = vpop.f32.mrf.mxu0
      %741 = vmatprep.mubr.bf16.mxu0 0
      %742 = vmatmul.mubr.bf16.gmra.mxu0 %v633
      %v743 = vpop.f32.mrf.mxu0
      %v744 = vadd.f32 0.0, %v743
      %v745 = vpop.f32.mrf.mxu0
      %v746 = vpop.f32.mrf.mxu0
      %v747 = vadd.f32 0.0, %v746
      %v748 = vpop.f32.mrf.mxu0
      %749 = vmatprep.mubr.bf16.mxu0 0
      %750 = vmatmul.mubr.bf16.gmra.mxu0 %v634
      %v751 = vpop.f32.mrf.mxu0
      %v752 = vadd.f32 0.0, %v751
      %v753 = vpop.f32.mrf.mxu0
      %v754 = vpop.f32.mrf.mxu0
      %v755 = vadd.f32 0.0, %v754
      %v756 = vpop.f32.mrf.mxu0
      %757 = vmatprep.mubr.bf16.mxu0 0
      %758 = vmatmul.mubr.bf16.gmra.mxu0 %v635
      %v759 = vpop.f32.mrf.mxu0
      %v760 = vadd.f32 0.0, %v759
      %v761 = vpop.f32.mrf.mxu0
      %v762 = vpop.f32.mrf.mxu0
      %v763 = vadd.f32 0.0, %v762
      %v764 = vpop.f32.mrf.mxu0
      %765 = vdwg.mxu0
      %v766 = vadd.f32 %v594, %v736
      %v767 = vadd.f32 %v597, %v739
      %v768 = vadd.f32 %v602, %v744
      %v769 = vadd.f32 %v605, %v747
      %v770 = vadd.f32 %v610, %v752
      %v771 = vadd.f32 %v613, %v755
      %v772 = vadd.f32 %v618, %v760
      %v773 = vadd.f32 %v621, %v763
      %v774 = vld [vmem:[%s332] sm:$0xff]
      %v775 = vld [vmem:[%s332 + $0x10] sm:$0xff]
      %v776 = vld [vmem:[%s332 + $0x20] sm:$0xff]
      %v777 = vld [vmem:[%s332 + $0x30] sm:$0xff]
      %v778 = vld [vmem:[%s332 + $0x40] sm:$0xff]
      %v779 = vld [vmem:[%s332 + $0x50] sm:$0xff]
      %v780 = vld [vmem:[%s332 + $0x60] sm:$0xff]
      %v781 = vld [vmem:[%s332 + $0x70] sm:$0xff]
      %v782 = vpack.c.bf16 %v775, %v774
      %v783 = vpack.c.bf16 %v777, %v776
      %v784 = vpack.c.bf16 %v779, %v778
      %v785 = vpack.c.bf16 %v781, %v780
      %s786 = scalar_lea.vmem %s3, 192
      %v787 = vld [vmem:[%s786] sm:$0xf]
      %v788 = vld [vmem:[%s786 + $0x4] sm:$0xf]
      %v789 = vld [vmem:[%s786 + $0x8] sm:$0xf]
      %v790 = vld [vmem:[%s786 + $0xc] sm:$0xf]
      %v791 = vld [vmem:[%s786 + $0x10] sm:$0xf]
      %v792 = vld [vmem:[%s786 + $0x14] sm:$0xf]
      %v793 = vld [vmem:[%s786 + $0x18] sm:$0xf]
      %v794 = vld [vmem:[%s786 + $0x1c] sm:$0xf]
      %v795 = vld [vmem:[%s786 + $0x20] sm:$0xf]
      %v796 = vld [vmem:[%s786 + $0x24] sm:$0xf]
      %v797 = vld [vmem:[%s786 + $0x28] sm:$0xf]
      %v798 = vld [vmem:[%s786 + $0x2c] sm:$0xf]
      %v799 = vld [vmem:[%s786 + $0x30] sm:$0xf]
      %v800 = vld [vmem:[%s786 + $0x34] sm:$0xf]
      %v801 = vld [vmem:[%s786 + $0x38] sm:$0xf]
      %v802 = vld [vmem:[%s786 + $0x3c] sm:$0xf]
      %v819 = vunpack.c.l.b16 %v787
      %v820 = vunpack.c.l.b16 %v788
      %v821 = vunpack.c.l.b16 %v789
      %v822 = vunpack.c.l.b16 %v790
      %v823 = vunpack.c.l.b16 %v791
      %v824 = vunpack.c.l.b16 %v792
      %v825 = vunpack.c.l.b16 %v793
      %v826 = vunpack.c.l.b16 %v794
      %v827 = vunpack.c.l.b16 %v795
      %v828 = vunpack.c.l.b16 %v796
      %v829 = vunpack.c.l.b16 %v797
      %v830 = vunpack.c.l.b16 %v798
      %v831 = vunpack.c.l.b16 %v799
      %v832 = vunpack.c.l.b16 %v800
      %v833 = vunpack.c.l.b16 %v801
      %v834 = vunpack.c.l.b16 %v802
      %v835 = vpack.c.b16 %v820, %v819
      %v836 = vpack.c.b16 %v822, %v821
      %v837 = vpack.c.b16 %v824, %v823
      %v838 = vpack.c.b16 %v826, %v825
      %v839 = vpack.c.b16 %v828, %v827
      %v840 = vpack.c.b16 %v830, %v829
      %v841 = vpack.c.b16 %v832, %v831
      %v842 = vpack.c.b16 %v834, %v833
      %851 = vmatprep.subr.bf16.mxu0 0
      %852 = vmatpush1.bf16.msra.mxu0 %v842
      %853 = vmatprep.subr.bf16.mxu0 0
      %854 = vmatpush1.bf16.msra.mxu0 %v841
      %855 = vmatprep.subr.bf16.mxu0 0
      %856 = vmatpush1.bf16.msra.mxu0 %v840
      %857 = vmatprep.subr.bf16.mxu0 0
      %858 = vmatpush1.bf16.msra.mxu0 %v839
      %859 = vmatprep.subr.bf16.mxu0 0
      %860 = vmatpush1.bf16.msra.mxu0 %v838
      %861 = vmatprep.subr.bf16.mxu0 0
      %862 = vmatpush1.bf16.msra.mxu0 %v837
      %863 = vmatprep.subr.bf16.mxu0 0
      %864 = vmatpush1.bf16.msra.mxu0 %v836
      %865 = vmatprep.subr.bf16.mxu0 0
      %866 = vmatpush1.bf16.msra.mxu0 %v835
      %867 = vmatprep.subr.bf16.mxu0 0
      %868 = vmatpush2.bf16.msra.mxu0 0
      %869 = vmatprep.subr.bf16.mxu0 0
      %870 = vmatpush2.bf16.msra.mxu0 0
      %871 = vmatprep.subr.bf16.mxu0 0
      %872 = vmatpush2.bf16.msra.mxu0 0
      %873 = vmatprep.subr.bf16.mxu0 0
      %874 = vmatpush2.bf16.msra.mxu0 0
      %875 = vmatprep.subr.bf16.mxu0 0
      %876 = vmatpush2.bf16.msra.mxu0 0
      %877 = vmatprep.subr.bf16.mxu0 0
      %878 = vmatpush2.bf16.msra.mxu0 0
      %879 = vmatprep.subr.bf16.mxu0 0
      %880 = vmatpush2.bf16.msra.mxu0 0
      %881 = vmatprep.subr.bf16.mxu0 0
      %882 = vmatpush2.bf16.msra.mxu0 0
      %883 = vmatprep.mubr.bf16.mxu0 0
      %884 = vmatmul.mubr.bf16.gmra.mxu0 %v782
      %v885 = vpop.f32.mrf.mxu0
      %v886 = vadd.f32 0.0, %v885
      %v887 = vpop.f32.mrf.mxu0
      %v888 = vpop.f32.mrf.mxu0
      %v889 = vadd.f32 0.0, %v888
      %v890 = vpop.f32.mrf.mxu0
      %891 = vmatprep.mubr.bf16.mxu0 0
      %892 = vmatmul.mubr.bf16.gmra.mxu0 %v783
      %v893 = vpop.f32.mrf.mxu0
      %v894 = vadd.f32 0.0, %v893
      %v895 = vpop.f32.mrf.mxu0
      %v896 = vpop.f32.mrf.mxu0
      %v897 = vadd.f32 0.0, %v896
      %v898 = vpop.f32.mrf.mxu0
      %899 = vmatprep.mubr.bf16.mxu0 0
      %900 = vmatmul.mubr.bf16.gmra.mxu0 %v784
      %v901 = vpop.f32.mrf.mxu0
      %v902 = vadd.f32 0.0, %v901
      %v903 = vpop.f32.mrf.mxu0
      %v904 = vpop.f32.mrf.mxu0
      %v905 = vadd.f32 0.0, %v904
      %v906 = vpop.f32.mrf.mxu0
      %907 = vmatprep.mubr.bf16.mxu0 0
      %908 = vmatmul.mubr.bf16.gmra.mxu0 %v785
      %v909 = vpop.f32.mrf.mxu0
      %v910 = vadd.f32 0.0, %v909
      %v911 = vpop.f32.mrf.mxu0
      %v912 = vpop.f32.mrf.mxu0
      %v913 = vadd.f32 0.0, %v912
      %v914 = vpop.f32.mrf.mxu0
      %915 = vdwg.mxu0
      %v916 = vadd.f32 %v766, %v886
      %v917 = vadd.f32 %v767, %v889
      %v918 = vadd.f32 %v768, %v894
      %v919 = vadd.f32 %v769, %v897
      %v920 = vadd.f32 %v770, %v902
      %v921 = vadd.f32 %v771, %v905
      %v922 = vadd.f32 %v772, %v910
      %v923 = vadd.f32 %v773, %v913
      %v924 = vld [vmem:[%s332 + $0x1] sm:$0xff]
      %v925 = vld [vmem:[%s332 + $0x11] sm:$0xff]
      %v926 = vld [vmem:[%s332 + $0x21] sm:$0xff]
      %v927 = vld [vmem:[%s332 + $0x31] sm:$0xff]
      %v928 = vld [vmem:[%s332 + $0x41] sm:$0xff]
      %v929 = vld [vmem:[%s332 + $0x51] sm:$0xff]
      %v930 = vld [vmem:[%s332 + $0x61] sm:$0xff]
      %v931 = vld [vmem:[%s332 + $0x71] sm:$0xff]
      %v932 = vpack.c.bf16 %v925, %v924
      %v933 = vpack.c.bf16 %v927, %v926
      %v934 = vpack.c.bf16 %v929, %v928
      %v935 = vpack.c.bf16 %v931, %v930
      %s936 = scalar_lea.vmem %s3, 256
      %v937 = vld [vmem:[%s936] sm:$0xf]
      %v938 = vld [vmem:[%s936 + $0x4] sm:$0xf]
      %v939 = vld [vmem:[%s936 + $0x8] sm:$0xf]
      %v940 = vld [vmem:[%s936 + $0xc] sm:$0xf]
      %v941 = vld [vmem:[%s936 + $0x10] sm:$0xf]
      %v942 = vld [vmem:[%s936 + $0x14] sm:$0xf]
      %v943 = vld [vmem:[%s936 + $0x18] sm:$0xf]
      %v944 = vld [vmem:[%s936 + $0x1c] sm:$0xf]
      %v945 = vld [vmem:[%s936 + $0x20] sm:$0xf]
      %v946 = vld [vmem:[%s936 + $0x24] sm:$0xf]
      %v947 = vld [vmem:[%s936 + $0x28] sm:$0xf]
      %v948 = vld [vmem:[%s936 + $0x2c] sm:$0xf]
      %v949 = vld [vmem:[%s936 + $0x30] sm:$0xf]
      %v950 = vld [vmem:[%s936 + $0x34] sm:$0xf]
      %v951 = vld [vmem:[%s936 + $0x38] sm:$0xf]
      %v952 = vld [vmem:[%s936 + $0x3c] sm:$0xf]
      %v969 = vunpack.c.l.b16 %v937
      %v970 = vunpack.c.l.b16 %v938
      %v971 = vunpack.c.l.b16 %v939
      %v972 = vunpack.c.l.b16 %v940
      %v973 = vunpack.c.l.b16 %v941
      %v974 = vunpack.c.l.b16 %v942
      %v975 = vunpack.c.l.b16 %v943
      %v976 = vunpack.c.l.b16 %v944
      %v977 = vunpack.c.l.b16 %v945
      %v978 = vunpack.c.l.b16 %v946
      %v979 = vunpack.c.l.b16 %v947
      %v980 = vunpack.c.l.b16 %v948
      %v981 = vunpack.c.l.b16 %v949
      %v982 = vunpack.c.l.b16 %v950
      %v983 = vunpack.c.l.b16 %v951
      %v984 = vunpack.c.l.b16 %v952
      %v985 = vpack.c.b16 %v970, %v969
      %v986 = vpack.c.b16 %v972, %v971
      %v987 = vpack.c.b16 %v974, %v973
      %v988 = vpack.c.b16 %v976, %v975
      %v989 = vpack.c.b16 %v978, %v977
      %v990 = vpack.c.b16 %v980, %v979
      %v991 = vpack.c.b16 %v982, %v981
      %v992 = vpack.c.b16 %v984, %v983
      %1001 = vmatprep.subr.bf16.mxu0 0
      %1002 = vmatpush1.bf16.msra.mxu0 %v992
      %1003 = vmatprep.subr.bf16.mxu0 0
      %1004 = vmatpush1.bf16.msra.mxu0 %v991
      %1005 = vmatprep.subr.bf16.mxu0 0
      %1006 = vmatpush1.bf16.msra.mxu0 %v990
      %1007 = vmatprep.subr.bf16.mxu0 0
      %1008 = vmatpush1.bf16.msra.mxu0 %v989
      %1009 = vmatprep.subr.bf16.mxu0 0
      %1010 = vmatpush1.bf16.msra.mxu0 %v988
      %1011 = vmatprep.subr.bf16.mxu0 0
      %1012 = vmatpush1.bf16.msra.mxu0 %v987
      %1013 = vmatprep.subr.bf16.mxu0 0
      %1014 = vmatpush1.bf16.msra.mxu0 %v986
      %1015 = vmatprep.subr.bf16.mxu0 0
      %1016 = vmatpush1.bf16.msra.mxu0 %v985
      %1017 = vmatprep.subr.bf16.mxu0 0
      %1018 = vmatpush2.bf16.msra.mxu0 0
      %1019 = vmatprep.subr.bf16.mxu0 0
      %1020 = vmatpush2.bf16.msra.mxu0 0
      %1021 = vmatprep.subr.bf16.mxu0 0
      %1022 = vmatpush2.bf16.msra.mxu0 0
      %1023 = vmatprep.subr.bf16.mxu0 0
      %1024 = vmatpush2.bf16.msra.mxu0 0
      %1025 = vmatprep.subr.bf16.mxu0 0
      %1026 = vmatpush2.bf16.msra.mxu0 0
      %1027 = vmatprep.subr.bf16.mxu0 0
      %1028 = vmatpush2.bf16.msra.mxu0 0
      %1029 = vmatprep.subr.bf16.mxu0 0
      %1030 = vmatpush2.bf16.msra.mxu0 0
      %1031 = vmatprep.subr.bf16.mxu0 0
      %1032 = vmatpush2.bf16.msra.mxu0 0
      %1033 = vmatprep.mubr.bf16.mxu0 0
      %1034 = vmatmul.mubr.bf16.gmra.mxu0 %v932
      %v1035 = vpop.f32.mrf.mxu0
      %v1036 = vadd.f32 0.0, %v1035
      %v1037 = vpop.f32.mrf.mxu0
      %v1038 = vpop.f32.mrf.mxu0
      %v1039 = vadd.f32 0.0, %v1038
      %v1040 = vpop.f32.mrf.mxu0
      %1041 = vmatprep.mubr.bf16.mxu0 0
      %1042 = vmatmul.mubr.bf16.gmra.mxu0 %v933
      %v1043 = vpop.f32.mrf.mxu0
      %v1044 = vadd.f32 0.0, %v1043
      %v1045 = vpop.f32.mrf.mxu0
      %v1046 = vpop.f32.mrf.mxu0
      %v1047 = vadd.f32 0.0, %v1046
      %v1048 = vpop.f32.mrf.mxu0
      %1049 = vmatprep.mubr.bf16.mxu0 0
      %1050 = vmatmul.mubr.bf16.gmra.mxu0 %v934
      %v1051 = vpop.f32.mrf.mxu0
      %v1052 = vadd.f32 0.0, %v1051
      %v1053 = vpop.f32.mrf.mxu0
      %v1054 = vpop.f32.mrf.mxu0
      %v1055 = vadd.f32 0.0, %v1054
      %v1056 = vpop.f32.mrf.mxu0
      %1057 = vmatprep.mubr.bf16.mxu0 0
      %1058 = vmatmul.mubr.bf16.gmra.mxu0 %v935
      %v1059 = vpop.f32.mrf.mxu0
      %v1060 = vadd.f32 0.0, %v1059
      %v1061 = vpop.f32.mrf.mxu0
      %v1062 = vpop.f32.mrf.mxu0
      %v1063 = vadd.f32 0.0, %v1062
      %v1064 = vpop.f32.mrf.mxu0
      %1065 = vdwg.mxu0
      %v1066 = vadd.f32 %v916, %v1036
      %v1067 = vadd.f32 %v917, %v1039
      %v1068 = vadd.f32 %v918, %v1044
      %v1069 = vadd.f32 %v919, %v1047
      %v1070 = vadd.f32 %v920, %v1052
      %v1071 = vadd.f32 %v921, %v1055
      %v1072 = vadd.f32 %v922, %v1060
      %v1073 = vadd.f32 %v923, %v1063
      %v1074 = vld [vmem:[%s332 + $0x2] sm:$0xff]
      %v1075 = vld [vmem:[%s332 + $0x12] sm:$0xff]
      %v1076 = vld [vmem:[%s332 + $0x22] sm:$0xff]
      %v1077 = vld [vmem:[%s332 + $0x32] sm:$0xff]
      %v1078 = vld [vmem:[%s332 + $0x42] sm:$0xff]
      %v1079 = vld [vmem:[%s332 + $0x52] sm:$0xff]
      %v1080 = vld [vmem:[%s332 + $0x62] sm:$0xff]
      %v1081 = vld [vmem:[%s332 + $0x72] sm:$0xff]
      %v1082 = vpack.c.bf16 %v1075, %v1074
      %v1083 = vpack.c.bf16 %v1077, %v1076
      %v1084 = vpack.c.bf16 %v1079, %v1078
      %v1085 = vpack.c.bf16 %v1081, %v1080
      %s1086 = scalar_lea.vmem %s3, 320
      %v1087 = vld [vmem:[%s1086] sm:$0xf]
      %v1088 = vld [vmem:[%s1086 + $0x4] sm:$0xf]
      %v1089 = vld [vmem:[%s1086 + $0x8] sm:$0xf]
      %v1090 = vld [vmem:[%s1086 + $0xc] sm:$0xf]
      %v1091 = vld [vmem:[%s1086 + $0x10] sm:$0xf]
      %v1092 = vld [vmem:[%s1086 + $0x14] sm:$0xf]
      %v1093 = vld [vmem:[%s1086 + $0x18] sm:$0xf]
      %v1094 = vld [vmem:[%s1086 + $0x1c] sm:$0xf]
      %v1095 = vld [vmem:[%s1086 + $0x20] sm:$0xf]
      %v1096 = vld [vmem:[%s1086 + $0x24] sm:$0xf]
      %v1097 = vld [vmem:[%s1086 + $0x28] sm:$0xf]
      %v1098 = vld [vmem:[%s1086 + $0x2c] sm:$0xf]
      %v1099 = vld [vmem:[%s1086 + $0x30] sm:$0xf]
      %v1100 = vld [vmem:[%s1086 + $0x34] sm:$0xf]
      %v1101 = vld [vmem:[%s1086 + $0x38] sm:$0xf]
      %v1102 = vld [vmem:[%s1086 + $0x3c] sm:$0xf]
      %v1119 = vunpack.c.l.b16 %v1087
      %v1120 = vunpack.c.l.b16 %v1088
      %v1121 = vunpack.c.l.b16 %v1089
      %v1122 = vunpack.c.l.b16 %v1090
      %v1123 = vunpack.c.l.b16 %v1091
      %v1124 = vunpack.c.l.b16 %v1092
      %v1125 = vunpack.c.l.b16 %v1093
      %v1126 = vunpack.c.l.b16 %v1094
      %v1127 = vunpack.c.l.b16 %v1095
      %v1128 = vunpack.c.l.b16 %v1096
      %v1129 = vunpack.c.l.b16 %v1097
      %v1130 = vunpack.c.l.b16 %v1098
      %v1131 = vunpack.c.l.b16 %v1099
      %v1132 = vunpack.c.l.b16 %v1100
      %v1133 = vunpack.c.l.b16 %v1101
      %v1134 = vunpack.c.l.b16 %v1102
      %v1135 = vpack.c.b16 %v1120, %v1119
      %v1136 = vpack.c.b16 %v1122, %v1121
      %v1137 = vpack.c.b16 %v1124, %v1123
      %v1138 = vpack.c.b16 %v1126, %v1125
      %v1139 = vpack.c.b16 %v1128, %v1127
      %v1140 = vpack.c.b16 %v1130, %v1129
      %v1141 = vpack.c.b16 %v1132, %v1131
      %v1142 = vpack.c.b16 %v1134, %v1133
      %1151 = vmatprep.subr.bf16.mxu0 0
      %1152 = vmatpush1.bf16.msra.mxu0 %v1142
      %1153 = vmatprep.subr.bf16.mxu0 0
      %1154 = vmatpush1.bf16.msra.mxu0 %v1141
      %1155 = vmatprep.subr.bf16.mxu0 0
      %1156 = vmatpush1.bf16.msra.mxu0 %v1140
      %1157 = vmatprep.subr.bf16.mxu0 0
      %1158 = vmatpush1.bf16.msra.mxu0 %v1139
      %1159 = vmatprep.subr.bf16.mxu0 0
      %1160 = vmatpush1.bf16.msra.mxu0 %v1138
      %1161 = vmatprep.subr.bf16.mxu0 0
      %1162 = vmatpush1.bf16.msra.mxu0 %v1137
      %1163 = vmatprep.subr.bf16.mxu0 0
      %1164 = vmatpush1.bf16.msra.mxu0 %v1136
      %1165 = vmatprep.subr.bf16.mxu0 0
      %1166 = vmatpush1.bf16.msra.mxu0 %v1135
      %1167 = vmatprep.subr.bf16.mxu0 0
      %1168 = vmatpush2.bf16.msra.mxu0 0
      %1169 = vmatprep.subr.bf16.mxu0 0
      %1170 = vmatpush2.bf16.msra.mxu0 0
      %1171 = vmatprep.subr.bf16.mxu0 0
      %1172 = vmatpush2.bf16.msra.mxu0 0
      %1173 = vmatprep.subr.bf16.mxu0 0
      %1174 = vmatpush2.bf16.msra.mxu0 0
      %1175 = vmatprep.subr.bf16.mxu0 0
      %1176 = vmatpush2.bf16.msra.mxu0 0
      %1177 = vmatprep.subr.bf16.mxu0 0
      %1178 = vmatpush2.bf16.msra.mxu0 0
      %1179 = vmatprep.subr.bf16.mxu0 0
      %1180 = vmatpush2.bf16.msra.mxu0 0
      %1181 = vmatprep.subr.bf16.mxu0 0
      %1182 = vmatpush2.bf16.msra.mxu0 0
      %1183 = vmatprep.mubr.bf16.mxu0 0
      %1184 = vmatmul.mubr.bf16.gmra.mxu0 %v1082
      %v1185 = vpop.f32.mrf.mxu0
      %v1186 = vadd.f32 0.0, %v1185
      %v1187 = vpop.f32.mrf.mxu0
      %v1188 = vpop.f32.mrf.mxu0
      %v1189 = vadd.f32 0.0, %v1188
      %v1190 = vpop.f32.mrf.mxu0
      %1191 = vmatprep.mubr.bf16.mxu0 0
      %1192 = vmatmul.mubr.bf16.gmra.mxu0 %v1083
      %v1193 = vpop.f32.mrf.mxu0
      %v1194 = vadd.f32 0.0, %v1193
      %v1195 = vpop.f32.mrf.mxu0
      %v1196 = vpop.f32.mrf.mxu0
      %v1197 = vadd.f32 0.0, %v1196
      %v1198 = vpop.f32.mrf.mxu0
      %1199 = vmatprep.mubr.bf16.mxu0 0
      %1200 = vmatmul.mubr.bf16.gmra.mxu0 %v1084
      %v1201 = vpop.f32.mrf.mxu0
      %v1202 = vadd.f32 0.0, %v1201
      %v1203 = vpop.f32.mrf.mxu0
      %v1204 = vpop.f32.mrf.mxu0
      %v1205 = vadd.f32 0.0, %v1204
      %v1206 = vpop.f32.mrf.mxu0
      %1207 = vmatprep.mubr.bf16.mxu0 0
      %1208 = vmatmul.mubr.bf16.gmra.mxu0 %v1085
      %v1209 = vpop.f32.mrf.mxu0
      %v1210 = vadd.f32 0.0, %v1209
      %v1211 = vpop.f32.mrf.mxu0
      %v1212 = vpop.f32.mrf.mxu0
      %v1213 = vadd.f32 0.0, %v1212
      %v1214 = vpop.f32.mrf.mxu0
      %1215 = vdwg.mxu0
      %v1216 = vadd.f32 %v1066, %v1186
      %v1217 = vadd.f32 %v1067, %v1189
      %v1218 = vadd.f32 %v1068, %v1194
      %v1219 = vadd.f32 %v1069, %v1197
      %v1220 = vadd.f32 %v1070, %v1202
      %v1221 = vadd.f32 %v1071, %v1205
      %v1222 = vadd.f32 %v1072, %v1210
      %v1223 = vadd.f32 %v1073, %v1213
      %s1224 = scalar_lea.vmem [#allocation2], 32
      %v1225 = vld [vmem:[%s1224] sm:$0xff]
      %v1226 = vld [vmem:[%s1224 + $0x10] sm:$0xff]
      %v1227 = vld [vmem:[%s1224 + $0x20] sm:$0xff]
      %v1228 = vld [vmem:[%s1224 + $0x30] sm:$0xff]
      %v1229 = vld [vmem:[%s1224 + $0x40] sm:$0xff]
      %v1230 = vld [vmem:[%s1224 + $0x50] sm:$0xff]
      %v1231 = vld [vmem:[%s1224 + $0x60] sm:$0xff]
      %v1232 = vld [vmem:[%s1224 + $0x70] sm:$0xff]
      %v1233 = vpack.c.bf16 %v1226, %v1225
      %v1234 = vpack.c.bf16 %v1228, %v1227
      %v1235 = vpack.c.bf16 %v1230, %v1229
      %v1236 = vpack.c.bf16 %v1232, %v1231
      %s1237 = scalar_lea.vmem %s3, 384
      %v1238 = vld [vmem:[%s1237] sm:$0xf]
      %v1239 = vld [vmem:[%s1237 + $0x4] sm:$0xf]
      %v1240 = vld [vmem:[%s1237 + $0x8] sm:$0xf]
      %v1241 = vld [vmem:[%s1237 + $0xc] sm:$0xf]
      %v1242 = vld [vmem:[%s1237 + $0x10] sm:$0xf]
      %v1243 = vld [vmem:[%s1237 + $0x14] sm:$0xf]
      %v1244 = vld [vmem:[%s1237 + $0x18] sm:$0xf]
      %v1245 = vld [vmem:[%s1237 + $0x1c] sm:$0xf]
      %v1246 = vld [vmem:[%s1237 + $0x20] sm:$0xf]
      %v1247 = vld [vmem:[%s1237 + $0x24] sm:$0xf]
      %v1248 = vld [vmem:[%s1237 + $0x28] sm:$0xf]
      %v1249 = vld [vmem:[%s1237 + $0x2c] sm:$0xf]
      %v1250 = vld [vmem:[%s1237 + $0x30] sm:$0xf]
      %v1251 = vld [vmem:[%s1237 + $0x34] sm:$0xf]
      %v1252 = vld [vmem:[%s1237 + $0x38] sm:$0xf]
      %v1253 = vld [vmem:[%s1237 + $0x3c] sm:$0xf]
      %v1270 = vunpack.c.l.b16 %v1238
      %v1271 = vunpack.c.l.b16 %v1239
      %v1272 = vunpack.c.l.b16 %v1240
      %v1273 = vunpack.c.l.b16 %v1241
      %v1274 = vunpack.c.l.b16 %v1242
      %v1275 = vunpack.c.l.b16 %v1243
      %v1276 = vunpack.c.l.b16 %v1244
      %v1277 = vunpack.c.l.b16 %v1245
      %v1278 = vunpack.c.l.b16 %v1246
      %v1279 = vunpack.c.l.b16 %v1247
      %v1280 = vunpack.c.l.b16 %v1248
      %v1281 = vunpack.c.l.b16 %v1249
      %v1282 = vunpack.c.l.b16 %v1250
      %v1283 = vunpack.c.l.b16 %v1251
      %v1284 = vunpack.c.l.b16 %v1252
      %v1285 = vunpack.c.l.b16 %v1253
      %v1286 = vpack.c.b16 %v1271, %v1270
      %v1287 = vpack.c.b16 %v1273, %v1272
      %v1288 = vpack.c.b16 %v1275, %v1274
      %v1289 = vpack.c.b16 %v1277, %v1276
      %v1290 = vpack.c.b16 %v1279, %v1278
      %v1291 = vpack.c.b16 %v1281, %v1280
      %v1292 = vpack.c.b16 %v1283, %v1282
      %v1293 = vpack.c.b16 %v1285, %v1284
      %1302 = vmatprep.subr.bf16.mxu0 0
      %1303 = vmatpush1.bf16.msra.mxu0 %v1293
      %1304 = vmatprep.subr.bf16.mxu0 0
      %1305 = vmatpush1.bf16.msra.mxu0 %v1292
      %1306 = vmatprep.subr.bf16.mxu0 0
      %1307 = vmatpush1.bf16.msra.mxu0 %v1291
      %1308 = vmatprep.subr.bf16.mxu0 0
      %1309 = vmatpush1.bf16.msra.mxu0 %v1290
      %1310 = vmatprep.subr.bf16.mxu0 0
      %1311 = vmatpush1.bf16.msra.mxu0 %v1289
      %1312 = vmatprep.subr.bf16.mxu0 0
      %1313 = vmatpush1.bf16.msra.mxu0 %v1288
      %1314 = vmatprep.subr.bf16.mxu0 0
      %1315 = vmatpush1.bf16.msra.mxu0 %v1287
      %1316 = vmatprep.subr.bf16.mxu0 0
      %1317 = vmatpush1.bf16.msra.mxu0 %v1286
      %1318 = vmatprep.subr.bf16.mxu0 0
      %1319 = vmatpush2.bf16.msra.mxu0 0
      %1320 = vmatprep.subr.bf16.mxu0 0
      %1321 = vmatpush2.bf16.msra.mxu0 0
      %1322 = vmatprep.subr.bf16.mxu0 0
      %1323 = vmatpush2.bf16.msra.mxu0 0
      %1324 = vmatprep.subr.bf16.mxu0 0
      %1325 = vmatpush2.bf16.msra.mxu0 0
      %1326 = vmatprep.subr.bf16.mxu0 0
      %1327 = vmatpush2.bf16.msra.mxu0 0
      %1328 = vmatprep.subr.bf16.mxu0 0
      %1329 = vmatpush2.bf16.msra.mxu0 0
      %1330 = vmatprep.subr.bf16.mxu0 0
      %1331 = vmatpush2.bf16.msra.mxu0 0
      %1332 = vmatprep.subr.bf16.mxu0 0
      %1333 = vmatpush2.bf16.msra.mxu0 0
      %1334 = vmatprep.mubr.bf16.mxu0 0
      %1335 = vmatmul.mubr.bf16.gmra.mxu0 %v1233
      %v1336 = vpop.f32.mrf.mxu0
      %v1337 = vadd.f32 0.0, %v1336
      %v1338 = vpop.f32.mrf.mxu0
      %v1339 = vpop.f32.mrf.mxu0
      %v1340 = vadd.f32 0.0, %v1339
      %v1341 = vpop.f32.mrf.mxu0
      %1342 = vmatprep.mubr.bf16.mxu0 0
      %1343 = vmatmul.mubr.bf16.gmra.mxu0 %v1234
      %v1344 = vpop.f32.mrf.mxu0
      %v1345 = vadd.f32 0.0, %v1344
      %v1346 = vpop.f32.mrf.mxu0
      %v1347 = vpop.f32.mrf.mxu0
      %v1348 = vadd.f32 0.0, %v1347
      %v1349 = vpop.f32.mrf.mxu0
      %1350 = vmatprep.mubr.bf16.mxu0 0
      %1351 = vmatmul.mubr.bf16.gmra.mxu0 %v1235
      %v1352 = vpop.f32.mrf.mxu0
      %v1353 = vadd.f32 0.0, %v1352
      %v1354 = vpop.f32.mrf.mxu0
      %v1355 = vpop.f32.mrf.mxu0
      %v1356 = vadd.f32 0.0, %v1355
      %v1357 = vpop.f32.mrf.mxu0
      %1358 = vmatprep.mubr.bf16.mxu0 0
      %1359 = vmatmul.mubr.bf16.gmra.mxu0 %v1236
      %v1360 = vpop.f32.mrf.mxu0
      %v1361 = vadd.f32 0.0, %v1360
      %v1362 = vpop.f32.mrf.mxu0
      %v1363 = vpop.f32.mrf.mxu0
      %v1364 = vadd.f32 0.0, %v1363
      %v1365 = vpop.f32.mrf.mxu0
      %1366 = vdwg.mxu0
      %v1367 = vadd.f32 %v1216, %v1337
      %v1368 = vadd.f32 %v1217, %v1340
      %v1369 = vadd.f32 %v1218, %v1345
      %v1370 = vadd.f32 %v1219, %v1348
      %v1371 = vadd.f32 %v1220, %v1353
      %v1372 = vadd.f32 %v1221, %v1356
      %v1373 = vadd.f32 %v1222, %v1361
      %v1374 = vadd.f32 %v1223, %v1364
      %v1375 = vld [vmem:[%s1224 + $0x1] sm:$0xff]
      %v1376 = vld [vmem:[%s1224 + $0x11] sm:$0xff]
      %v1377 = vld [vmem:[%s1224 + $0x21] sm:$0xff]
      %v1378 = vld [vmem:[%s1224 + $0x31] sm:$0xff]
      %v1379 = vld [vmem:[%s1224 + $0x41] sm:$0xff]
      %v1380 = vld [vmem:[%s1224 + $0x51] sm:$0xff]
      %v1381 = vld [vmem:[%s1224 + $0x61] sm:$0xff]
      %v1382 = vld [vmem:[%s1224 + $0x71] sm:$0xff]
      %v1383 = vpack.c.bf16 %v1376, %v1375
      %v1384 = vpack.c.bf16 %v1378, %v1377
      %v1385 = vpack.c.bf16 %v1380, %v1379
      %v1386 = vpack.c.bf16 %v1382, %v1381
      %s1387 = scalar_lea.vmem %s3, 448
      %v1388 = vld [vmem:[%s1387] sm:$0xf]
      %v1389 = vld [vmem:[%s1387 + $0x4] sm:$0xf]
      %v1390 = vld [vmem:[%s1387 + $0x8] sm:$0xf]
      %v1391 = vld [vmem:[%s1387 + $0xc] sm:$0xf]
      %v1392 = vld [vmem:[%s1387 + $0x10] sm:$0xf]
      %v1393 = vld [vmem:[%s1387 + $0x14] sm:$0xf]
      %v1394 = vld [vmem:[%s1387 + $0x18] sm:$0xf]
      %v1395 = vld [vmem:[%s1387 + $0x1c] sm:$0xf]
      %v1396 = vld [vmem:[%s1387 + $0x20] sm:$0xf]
      %v1397 = vld [vmem:[%s1387 + $0x24] sm:$0xf]
      %v1398 = vld [vmem:[%s1387 + $0x28] sm:$0xf]
      %v1399 = vld [vmem:[%s1387 + $0x2c] sm:$0xf]
      %v1400 = vld [vmem:[%s1387 + $0x30] sm:$0xf]
      %v1401 = vld [vmem:[%s1387 + $0x34] sm:$0xf]
      %v1402 = vld [vmem:[%s1387 + $0x38] sm:$0xf]
      %v1403 = vld [vmem:[%s1387 + $0x3c] sm:$0xf]
      %v1420 = vunpack.c.l.b16 %v1388
      %v1421 = vunpack.c.l.b16 %v1389
      %v1422 = vunpack.c.l.b16 %v1390
      %v1423 = vunpack.c.l.b16 %v1391
      %v1424 = vunpack.c.l.b16 %v1392
      %v1425 = vunpack.c.l.b16 %v1393
      %v1426 = vunpack.c.l.b16 %v1394
      %v1427 = vunpack.c.l.b16 %v1395
      %v1428 = vunpack.c.l.b16 %v1396
      %v1429 = vunpack.c.l.b16 %v1397
      %v1430 = vunpack.c.l.b16 %v1398
      %v1431 = vunpack.c.l.b16 %v1399
      %v1432 = vunpack.c.l.b16 %v1400
      %v1433 = vunpack.c.l.b16 %v1401
      %v1434 = vunpack.c.l.b16 %v1402
      %v1435 = vunpack.c.l.b16 %v1403
      %v1436 = vpack.c.b16 %v1421, %v1420
      %v1437 = vpack.c.b16 %v1423, %v1422
      %v1438 = vpack.c.b16 %v1425, %v1424
      %v1439 = vpack.c.b16 %v1427, %v1426
      %v1440 = vpack.c.b16 %v1429, %v1428
      %v1441 = vpack.c.b16 %v1431, %v1430
      %v1442 = vpack.c.b16 %v1433, %v1432
      %v1443 = vpack.c.b16 %v1435, %v1434
      %1452 = vmatprep.subr.bf16.mxu0 0
      %1453 = vmatpush1.bf16.msra.mxu0 %v1443
      %1454 = vmatprep.subr.bf16.mxu0 0
      %1455 = vmatpush1.bf16.msra.mxu0 %v1442
      %1456 = vmatprep.subr.bf16.mxu0 0
      %1457 = vmatpush1.bf16.msra.mxu0 %v1441
      %1458 = vmatprep.subr.bf16.mxu0 0
      %1459 = vmatpush1.bf16.msra.mxu0 %v1440
      %1460 = vmatprep.subr.bf16.mxu0 0
      %1461 = vmatpush1.bf16.msra.mxu0 %v1439
      %1462 = vmatprep.subr.bf16.mxu0 0
      %1463 = vmatpush1.bf16.msra.mxu0 %v1438
      %1464 = vmatprep.subr.bf16.mxu0 0
      %1465 = vmatpush1.bf16.msra.mxu0 %v1437
      %1466 = vmatprep.subr.bf16.mxu0 0
      %1467 = vmatpush1.bf16.msra.mxu0 %v1436
      %1468 = vmatprep.subr.bf16.mxu0 0
      %1469 = vmatpush2.bf16.msra.mxu0 0
      %1470 = vmatprep.subr.bf16.mxu0 0
      %1471 = vmatpush2.bf16.msra.mxu0 0
      %1472 = vmatprep.subr.bf16.mxu0 0
      %1473 = vmatpush2.bf16.msra.mxu0 0
      %1474 = vmatprep.subr.bf16.mxu0 0
      %1475 = vmatpush2.bf16.msra.mxu0 0
      %1476 = vmatprep.subr.bf16.mxu0 0
      %1477 = vmatpush2.bf16.msra.mxu0 0
      %1478 = vmatprep.subr.bf16.mxu0 0
      %1479 = vmatpush2.bf16.msra.mxu0 0
      %1480 = vmatprep.subr.bf16.mxu0 0
      %1481 = vmatpush2.bf16.msra.mxu0 0
      %1482 = vmatprep.subr.bf16.mxu0 0
      %1483 = vmatpush2.bf16.msra.mxu0 0
      %1484 = vmatprep.mubr.bf16.mxu0 0
      %1485 = vmatmul.mubr.bf16.gmra.mxu0 %v1383
      %v1486 = vpop.f32.mrf.mxu0
      %v1487 = vadd.f32 0.0, %v1486
      %v1488 = vpop.f32.mrf.mxu0
      %v1489 = vpop.f32.mrf.mxu0
      %v1490 = vadd.f32 0.0, %v1489
      %v1491 = vpop.f32.mrf.mxu0
      %1492 = vmatprep.mubr.bf16.mxu0 0
      %1493 = vmatmul.mubr.bf16.gmra.mxu0 %v1384
      %v1494 = vpop.f32.mrf.mxu0
      %v1495 = vadd.f32 0.0, %v1494
      %v1496 = vpop.f32.mrf.mxu0
      %v1497 = vpop.f32.mrf.mxu0
      %v1498 = vadd.f32 0.0, %v1497
      %v1499 = vpop.f32.mrf.mxu0
      %1500 = vmatprep.mubr.bf16.mxu0 0
      %1501 = vmatmul.mubr.bf16.gmra.mxu0 %v1385
      %v1502 = vpop.f32.mrf.mxu0
      %v1503 = vadd.f32 0.0, %v1502
      %v1504 = vpop.f32.mrf.mxu0
      %v1505 = vpop.f32.mrf.mxu0
      %v1506 = vadd.f32 0.0, %v1505
      %v1507 = vpop.f32.mrf.mxu0
      %1508 = vmatprep.mubr.bf16.mxu0 0
      %1509 = vmatmul.mubr.bf16.gmra.mxu0 %v1386
      %v1510 = vpop.f32.mrf.mxu0
      %v1511 = vadd.f32 0.0, %v1510
      %v1512 = vpop.f32.mrf.mxu0
      %v1513 = vpop.f32.mrf.mxu0
      %v1514 = vadd.f32 0.0, %v1513
      %v1515 = vpop.f32.mrf.mxu0
      %1516 = vdwg.mxu0
      %v1517 = vadd.f32 %v1367, %v1487
      %v1518 = vadd.f32 %v1368, %v1490
      %v1519 = vadd.f32 %v1369, %v1495
      %v1520 = vadd.f32 %v1370, %v1498
      %v1521 = vadd.f32 %v1371, %v1503
      %v1522 = vadd.f32 %v1372, %v1506
      %v1523 = vadd.f32 %v1373, %v1511
      %v1524 = vadd.f32 %v1374, %v1514
      %v1525 = vld [vmem:[%s1224 + $0x2] sm:$0xff]
      %v1526 = vld [vmem:[%s1224 + $0x12] sm:$0xff]
      %v1527 = vld [vmem:[%s1224 + $0x22] sm:$0xff]
      %v1528 = vld [vmem:[%s1224 + $0x32] sm:$0xff]
      %v1529 = vld [vmem:[%s1224 + $0x42] sm:$0xff]
      %v1530 = vld [vmem:[%s1224 + $0x52] sm:$0xff]
      %v1531 = vld [vmem:[%s1224 + $0x62] sm:$0xff]
      %v1532 = vld [vmem:[%s1224 + $0x72] sm:$0xff]
      %v1533 = vpack.c.bf16 %v1526, %v1525
      %v1534 = vpack.c.bf16 %v1528, %v1527
      %v1535 = vpack.c.bf16 %v1530, %v1529
      %v1536 = vpack.c.bf16 %v1532, %v1531
      %s1537 = scalar_lea.vmem %s3, 512
      %v1538 = vld [vmem:[%s1537] sm:$0xf]
      %v1539 = vld [vmem:[%s1537 + $0x4] sm:$0xf]
      %v1540 = vld [vmem:[%s1537 + $0x8] sm:$0xf]
      %v1541 = vld [vmem:[%s1537 + $0xc] sm:$0xf]
      %v1542 = vld [vmem:[%s1537 + $0x10] sm:$0xf]
      %v1543 = vld [vmem:[%s1537 + $0x14] sm:$0xf]
      %v1544 = vld [vmem:[%s1537 + $0x18] sm:$0xf]
      %v1545 = vld [vmem:[%s1537 + $0x1c] sm:$0xf]
      %v1546 = vld [vmem:[%s1537 + $0x20] sm:$0xf]
      %v1547 = vld [vmem:[%s1537 + $0x24] sm:$0xf]
      %v1548 = vld [vmem:[%s1537 + $0x28] sm:$0xf]
      %v1549 = vld [vmem:[%s1537 + $0x2c] sm:$0xf]
      %v1550 = vld [vmem:[%s1537 + $0x30] sm:$0xf]
      %v1551 = vld [vmem:[%s1537 + $0x34] sm:$0xf]
      %v1552 = vld [vmem:[%s1537 + $0x38] sm:$0xf]
      %v1553 = vld [vmem:[%s1537 + $0x3c] sm:$0xf]
      %v1570 = vunpack.c.l.b16 %v1538
      %v1571 = vunpack.c.l.b16 %v1539
      %v1572 = vunpack.c.l.b16 %v1540
      %v1573 = vunpack.c.l.b16 %v1541
      %v1574 = vunpack.c.l.b16 %v1542
      %v1575 = vunpack.c.l.b16 %v1543
      %v1576 = vunpack.c.l.b16 %v1544
      %v1577 = vunpack.c.l.b16 %v1545
      %v1578 = vunpack.c.l.b16 %v1546
      %v1579 = vunpack.c.l.b16 %v1547
      %v1580 = vunpack.c.l.b16 %v1548
      %v1581 = vunpack.c.l.b16 %v1549
      %v1582 = vunpack.c.l.b16 %v1550
      %v1583 = vunpack.c.l.b16 %v1551
      %v1584 = vunpack.c.l.b16 %v1552
      %v1585 = vunpack.c.l.b16 %v1553
      %v1586 = vpack.c.b16 %v1571, %v1570
      %v1587 = vpack.c.b16 %v1573, %v1572
      %v1588 = vpack.c.b16 %v1575, %v1574
      %v1589 = vpack.c.b16 %v1577, %v1576
      %v1590 = vpack.c.b16 %v1579, %v1578
      %v1591 = vpack.c.b16 %v1581, %v1580
      %v1592 = vpack.c.b16 %v1583, %v1582
      %v1593 = vpack.c.b16 %v1585, %v1584
      %1602 = vmatprep.subr.bf16.mxu0 0
      %1603 = vmatpush1.bf16.msra.mxu0 %v1593
      %1604 = vmatprep.subr.bf16.mxu0 0
      %1605 = vmatpush1.bf16.msra.mxu0 %v1592
      %1606 = vmatprep.subr.bf16.mxu0 0
      %1607 = vmatpush1.bf16.msra.mxu0 %v1591
      %1608 = vmatprep.subr.bf16.mxu0 0
      %1609 = vmatpush1.bf16.msra.mxu0 %v1590
      %1610 = vmatprep.subr.bf16.mxu0 0
      %1611 = vmatpush1.bf16.msra.mxu0 %v1589
      %1612 = vmatprep.subr.bf16.mxu0 0
      %1613 = vmatpush1.bf16.msra.mxu0 %v1588
      %1614 = vmatprep.subr.bf16.mxu0 0
      %1615 = vmatpush1.bf16.msra.mxu0 %v1587
      %1616 = vmatprep.subr.bf16.mxu0 0
      %1617 = vmatpush1.bf16.msra.mxu0 %v1586
      %1618 = vmatprep.subr.bf16.mxu0 0
      %1619 = vmatpush2.bf16.msra.mxu0 0
      %1620 = vmatprep.subr.bf16.mxu0 0
      %1621 = vmatpush2.bf16.msra.mxu0 0
      %1622 = vmatprep.subr.bf16.mxu0 0
      %1623 = vmatpush2.bf16.msra.mxu0 0
      %1624 = vmatprep.subr.bf16.mxu0 0
      %1625 = vmatpush2.bf16.msra.mxu0 0
      %1626 = vmatprep.subr.bf16.mxu0 0
      %1627 = vmatpush2.bf16.msra.mxu0 0
      %1628 = vmatprep.subr.bf16.mxu0 0
      %1629 = vmatpush2.bf16.msra.mxu0 0
      %1630 = vmatprep.subr.bf16.mxu0 0
      %1631 = vmatpush2.bf16.msra.mxu0 0
      %1632 = vmatprep.subr.bf16.mxu0 0
      %1633 = vmatpush2.bf16.msra.mxu0 0
      %1634 = vmatprep.mubr.bf16.mxu0 0
      %1635 = vmatmul.mubr.bf16.gmra.mxu0 %v1533
      %v1636 = vpop.f32.mrf.mxu0
      %v1637 = vadd.f32 0.0, %v1636
      %v1638 = vpop.f32.mrf.mxu0
      %v1639 = vpop.f32.mrf.mxu0
      %v1640 = vadd.f32 0.0, %v1639
      %v1641 = vpop.f32.mrf.mxu0
      %1642 = vmatprep.mubr.bf16.mxu0 0
      %1643 = vmatmul.mubr.bf16.gmra.mxu0 %v1534
      %v1644 = vpop.f32.mrf.mxu0
      %v1645 = vadd.f32 0.0, %v1644
      %v1646 = vpop.f32.mrf.mxu0
      %v1647 = vpop.f32.mrf.mxu0
      %v1648 = vadd.f32 0.0, %v1647
      %v1649 = vpop.f32.mrf.mxu0
      %1650 = vmatprep.mubr.bf16.mxu0 0
      %1651 = vmatmul.mubr.bf16.gmra.mxu0 %v1535
      %v1652 = vpop.f32.mrf.mxu0
      %v1653 = vadd.f32 0.0, %v1652
      %v1654 = vpop.f32.mrf.mxu0
      %v1655 = vpop.f32.mrf.mxu0
      %v1656 = vadd.f32 0.0, %v1655
      %v1657 = vpop.f32.mrf.mxu0
      %1658 = vmatprep.mubr.bf16.mxu0 0
      %1659 = vmatmul.mubr.bf16.gmra.mxu0 %v1536
      %v1660 = vpop.f32.mrf.mxu0
      %v1661 = vadd.f32 0.0, %v1660
      %v1662 = vpop.f32.mrf.mxu0
      %v1663 = vpop.f32.mrf.mxu0
      %v1664 = vadd.f32 0.0, %v1663
      %v1665 = vpop.f32.mrf.mxu0
      %1666 = vdwg.mxu0
      %v1667 = vadd.f32 %v1517, %v1637
      %v1668 = vadd.f32 %v1518, %v1640
      %v1669 = vadd.f32 %v1519, %v1645
      %v1670 = vadd.f32 %v1520, %v1648
      %v1671 = vadd.f32 %v1521, %v1653
      %v1672 = vadd.f32 %v1522, %v1656
      %v1673 = vadd.f32 %v1523, %v1661
      %v1674 = vadd.f32 %v1524, %v1664
      %v1675 = vpack.c.bf16 %v1667, %v1667
      %v1676 = vpack.c.bf16 %v1668, %v1668
      %v1677 = vpack.c.bf16 %v1669, %v1669
      %v1678 = vpack.c.bf16 %v1670, %v1670
      %v1679 = vpack.c.bf16 %v1671, %v1671
      %v1680 = vpack.c.bf16 %v1672, %v1672
      %v1681 = vpack.c.bf16 %v1673, %v1673
      %v1682 = vpack.c.bf16 %v1674, %v1674
      %1683 = vst [vmem:[%s231] sm:$0xf] %v1675
      %1684 = vst [vmem:[%s231 + $0x4] sm:$0xf] %v1676
      %1685 = vst [vmem:[%s231 + $0x8] sm:$0xf] %v1677
      %1686 = vst [vmem:[%s231 + $0xc] sm:$0xf] %v1678
      %1687 = vst [vmem:[%s231 + $0x10] sm:$0xf] %v1679
      %1688 = vst [vmem:[%s231 + $0x14] sm:$0xf] %v1680
      %1689 = vst [vmem:[%s231 + $0x18] sm:$0xf] %v1681
      %1690 = vst [vmem:[%s231 + $0x1c] sm:$0xf] %v1682
      %v1691 = vadd.f32 %v1667, %v1668
      %v1692 = vadd.f32 %v1691, %v1669
      %v1693 = vadd.f32 %v1692, %v1670
      %v1694 = vadd.f32 %v1693, %v1671
      %v1695 = vadd.f32 %v1694, %v1672
      %v1696 = vadd.f32 %v1695, %v1673
      %v1697 = vadd.f32 %v1696, %v1674
      %v1698 = vrot.slane %v1697, 4
      %v1699 = vadd.f32 %v1697, %v1698
      %v1700 = vrot.slane %v1699, 2
      %v1701 = vadd.f32 %v1699, %v1700
      %v1702 = vrot.slane %v1701, 1
      %v1703 = vadd.f32 %v1701, %v1702
      %v1704 = vmul.f32 %v1667, %v1667
      %v1705 = vmul.f32 %v1668, %v1668
      %v1706 = vmul.f32 %v1669, %v1669
      %v1707 = vmul.f32 %v1670, %v1670
      %v1708 = vmul.f32 %v1671, %v1671
      %v1709 = vmul.f32 %v1672, %v1672
      %v1710 = vmul.f32 %v1673, %v1673
      %v1711 = vmul.f32 %v1674, %v1674
      %v1712 = vadd.f32 %v1704, %v1705
      %v1713 = vadd.f32 %v1712, %v1706
      %v1714 = vadd.f32 %v1713, %v1707
      %v1715 = vadd.f32 %v1714, %v1708
      %v1716 = vadd.f32 %v1715, %v1709
      %v1717 = vadd.f32 %v1716, %v1710
      %v1718 = vadd.f32 %v1717, %v1711
      %v1719 = vrot.slane %v1718, 4
      %v1720 = vadd.f32 %v1718, %v1719
      %v1721 = vrot.slane %v1720, 2
      %v1722 = vadd.f32 %v1720, %v1721
      %v1723 = vrot.slane %v1722, 1
      %v1724 = vadd.f32 %v1722, %v1723
      %vm1725 = vcmask 1040384
      %v1726 = vsel %vm1725, %v1703, %v1724
      %1727 = vst [vmem:[%s235] sm:$0x3] %v1726
      %p1728 = scmp.lt.s32.totalorder %s17, 1
      %s1729 = scalar_select %p1728, %s17, 1
      %s1730 = smul.addr %s1729, 8
      %s1731 = smul.addr %s1730, 4
      %s1732 = scalar_lea.vmem %s4, %s1731
      %p1733 = scmp.lt.s32.totalorder %s17, 1
      %s1734 = scalar_select %p1733, %s17, 1
      %s1735 = smul.addr %s1734, 2
      %s1736 = scalar_lea.vmem %s5, %s1735
      // Predicated region
      $region37: #{down_forward.3} parent=35 // pred_check
        %p1737 = pneg %p124
      $region38: #{down_forward.3} parent=35 // pred_check_branch
        %1739 = sbr.rel (%p1737) target = $region40
      $region39: #{down_forward.3} parent=35 // pred_region
        _
      $region40: #{down_forward.3} parent=35 // pred_fallthru
        _
      // Predicated region
      $region41: #{down_forward.3} parent=35 // pred_check
        %p1740 = pneg %p150
      $region42: #{down_forward.3} parent=35 // pred_check_branch
        %1742 = sbr.rel (%p1740) target = $region44
      $region43: #{down_forward.3} parent=35 // pred_region
        _
      $region44: #{down_forward.3} parent=35 // pred_fallthru
        _
    $region36: #{down_forward.3} parent=5 // pred_fallthru
      _
    %p1743 = scmp.le.s32.totalorder 2, %s12
    // Predicated region
    $region45: #{down_forward.3} parent=5 // pred_check
      %p1744 = pneg %p1743
    $region46: #{down_forward.3} parent=5 // pred_check_branch
      %1746 = sbr.rel (%p1744) target = $region48
    $region47: #{down_forward.3} parent=5 // pred_region
      %s1747 = ssub.s32 %s12, 2
      // Predicated region
      $region49: #{down_forward.3} parent=47 // pred_check
        %p1748 = pneg %p130
      $region50: #{down_forward.3} parent=47 // pred_check_branch
        %1750 = sbr.rel (%p1748) target = $region52
      $region51: #{down_forward.3} parent=47 // pred_region
        %p1751 = scmp.lt.s32.totalorder %s18, 1
        %s1752 = scalar_select %p1751, %s18, 1
        %s1753 = smul.addr %s1752, 8
        %s1754 = smul.addr %s1753, 4
        %s1755 = scalar_lea.vmem %s4, %s1754
      $region52: #{down_forward.3} parent=47 // pred_fallthru
        _
      // Predicated region
      $region53: #{down_forward.3} parent=47 // pred_check
        %p1756 = pneg %p156
      $region54: #{down_forward.3} parent=47 // pred_check_branch
        %1758 = sbr.rel (%p1756) target = $region56
      $region55: #{down_forward.3} parent=47 // pred_region
        %p1759 = scmp.lt.s32.totalorder %s18, 1
        %s1760 = scalar_select %p1759, %s18, 1
        %s1761 = smul.addr %s1760, 2
        %s1762 = scalar_lea.vmem %s5, %s1761
      $region56: #{down_forward.3} parent=47 // pred_fallthru
        _
    $region48: #{down_forward.3} parent=5 // pred_fallthru
      _
  $region6: #{down_forward.3} parent=0 // loop_footer
    %s16 = sadd.s32 1, %s12
  $region7: #{down_forward.3} parent=0 // loop_footer_branch
    %11 = sbr.rel target = $region3
  $region8: #{down_forward.3} parent=0 // loop_exit
    _

</llo_original>
